<compile_context>
chip_gen: v7x
topology: tpu7x:2x2x1
jax: 0.10.0
libtpu: 0.0.40
codegen_flags: <defaults>
</compile_context>

<pallas_src>
import functools
import math

import jax
import jax.numpy as jnp
import numpy as np
from jax.experimental import pallas as pl
from jax.experimental.pallas import tpu as pltpu


# ----------------------------------------------------------------------------
# Pallas kernel: attention + context + GRUCell + output (log)softmax
# ----------------------------------------------------------------------------
def decoder_kernel(
    ids_ref,       # (B,) int32   SMEM token ids
    h_ref,         # (B, H)       previous hidden state
    enc_ref,       # (B*L, C)     encoder outputs, batch-major, flattened
    w_word_ref,    # (E, H)       word_linear weight^T (embedding == eye)
    b_word_ref,    # (1, H)
    w_attn_h_ref,  # (H, H)       attn-linear slice acting on hidden
    w_attn_e_ref,  # (C, H)       attn-linear slice acting on encoder feats
    b_attn_ref,    # (1, H)
    v_ref,         # (1, H)
    w_ih_ref,      # (H+C, 3H)    fused GRU input weight^T ([we, ctx] rows)
    b_ih_ref,      # (1, 3H)
    w_hh_ref,      # (H, 3H)
    b_hh_ref,      # (1, 3H)
    w_out_ref,     # (H, O)
    b_out_ref,     # (1, O)
    out_ref,       # (B, O)       output distribution
    hid_ref,       # (B, H)       new hidden state
    attn_ref,      # (B, L)       attention weights (lane-dense)
    *,
    batch: int,
    seq_len: int,
    hidden_size: int,
    training: bool,
):
    B, L, Hs = batch, seq_len, hidden_size
    h_prev = h_ref[...]                                                   # (B, H)

    # --- embedding lookup + word_linear ------------------------------------
    # embedding weight == eye  =>  word_linear(onehot) = w_word^T[id] + b_word.
    we = jnp.concatenate(
        [w_word_ref[pl.ds(ids_ref[b], 1), :] for b in range(B)], axis=0
    ) + b_word_ref[...]                                                   # (B, H)

    # --- attention, vectorized over batch ----------------------------------
    h_proj = jnp.dot(h_prev, w_attn_h_ref[...],
                     preferred_element_type=jnp.float32) + b_attn_ref[...]  # (B, H)
    e_proj = jnp.dot(enc_ref[...], w_attn_e_ref[...],
                     preferred_element_type=jnp.float32)                  # (B*L, H)
    energy = jnp.tanh(jnp.reshape(e_proj, (B, L, Hs))
                      + h_proj[:, None, :])                               # (B, L, H)

    s = jnp.sum(energy * v_ref[...][None, :, :], axis=-1)                 # (B, L)
    s = s - jnp.max(s, axis=-1, keepdims=True)
    p = jnp.exp(s)
    a = p / jnp.sum(p, axis=-1, keepdims=True)                            # (B, L)
    attn_ref[...] = a                                                     # lane-dense

    # context = attn @ encoder_outputs, per batch (1,L)@(L,C) on the MXU,
    # kept in vregs (no VMEM scratch).
    ctx = jnp.concatenate(
        [jnp.dot(a[b:b + 1, :], enc_ref[b * L:(b + 1) * L, :],
                 preferred_element_type=jnp.float32) for b in range(B)],
        axis=0)                                                           # (B, C)

    # --- GRUCell([we, ctx], h_prev) with fused input weight ----------------
    rnn_in = jnp.concatenate([we, ctx], axis=1)                           # (B, H+C)
    gi = (jnp.dot(rnn_in, w_ih_ref[...], preferred_element_type=jnp.float32)
          + b_ih_ref[...])                                                # (B, 3H)
    gh = (jnp.dot(h_prev, w_hh_ref[...], preferred_element_type=jnp.float32)
          + b_hh_ref[...])                                                # (B, 3H)

    r = jax.nn.sigmoid(gi[:, :Hs] + gh[:, :Hs])
    z = jax.nn.sigmoid(gi[:, Hs:2 * Hs] + gh[:, Hs:2 * Hs])
    n = jnp.tanh(gi[:, 2 * Hs:] + r * gh[:, 2 * Hs:])
    h_new = (1.0 - z) * n + z * h_prev
    hid_ref[...] = h_new

    # --- output head: softmax (eval) / log_softmax (train) -----------------
    logits = (jnp.dot(h_new, w_out_ref[...], preferred_element_type=jnp.float32)
              + b_out_ref[...])                                           # (B, O)
    shifted = logits - jnp.max(logits, axis=-1, keepdims=True)
    ex = jnp.exp(shifted)
    denom = jnp.sum(ex, axis=-1, keepdims=True)
    if training:
        out_ref[...] = shifted - jnp.log(denom)
    else:
        out_ref[...] = ex / denom


# ----------------------------------------------------------------------------
# JAX wrapper (parameter plumbing, layout changes) around the Pallas kernel
# ----------------------------------------------------------------------------
def bahdanau_attn_decoder(word_input, last_hidden, encoder_outputs, params,
                          training: bool = False):
    B = word_input.shape[0]
    L, _, C = encoder_outputs.shape
    Hs, _E = params["w_word"].shape
    O = params["w_out"].shape[0]

    ids = word_input.astype(jnp.int32)                                    # (B,)
    enc_flat = (jnp.transpose(encoder_outputs, (1, 0, 2))
                .reshape(B * L, C).astype(jnp.float32))                   # (B*L, C)

    # pre-transpose / pre-split weights (glue)
    inputs = (
        ids,
        last_hidden.astype(jnp.float32),
        enc_flat,
        params["w_word"].T,                 # (E, H)
        params["b_word"][None, :],          # (1, H)
        params["w_attn"][:, :Hs].T,         # (H, H)
        params["w_attn"][:, Hs:].T,         # (C, H)
        params["b_attn"][None, :],          # (1, H)
        params["v"][None, :],               # (1, H)
        params["w_ih"].T,                   # (H+C, 3H) fused
        params["b_ih"][None, :],            # (1, 3H)
        params["w_hh"].T,                   # (H, 3H)
        params["b_hh"][None, :],            # (1, 3H)
        params["w_out"].T,                  # (H, O)
        params["b_out"][None, :],           # (1, O)
    )

    kernel = functools.partial(decoder_kernel, batch=B, seq_len=L,
                               hidden_size=Hs, training=training)

    out, h_new, attn = pl.pallas_call(
        kernel,
        out_shape=(
            jax.ShapeDtypeStruct((B, O), jnp.float32),
            jax.ShapeDtypeStruct((B, Hs), jnp.float32),
            jax.ShapeDtypeStruct((B, L), jnp.float32),
        ),
        in_specs=[pl.BlockSpec(memory_space=pltpu.MemorySpace.SMEM)]
                 + [pl.BlockSpec(memory_space=pltpu.MemorySpace.VMEM)]
                 * (len(inputs) - 1),
        out_specs=(
            pl.BlockSpec(memory_space=pltpu.MemorySpace.VMEM),
            pl.BlockSpec(memory_space=pltpu.MemorySpace.VMEM),
            pl.BlockSpec(memory_space=pltpu.MemorySpace.VMEM),
        ),
    )(*inputs)

    attn_weights = attn[:, None, :]                                       # (B, 1, L)
    return out, h_new, attn_weights


# ----------------------------------------------------------------------------
# Pure-JAX reference (mirrors the PyTorch forward) for correctness checking
# ----------------------------------------------------------------------------
def reference(word_input, last_hidden, encoder_outputs, params,
              training: bool = False):
    Hs, E = params["w_word"].shape
    onehot = jax.nn.one_hot(word_input, E, dtype=jnp.float32)
    we = onehot @ params["w_word"].T + params["b_word"]                   # (B, H)

    enc = jnp.transpose(encoder_outputs, (1, 0, 2))                       # (B, L, C)
    B, L, C = enc.shape
    Hrep = jnp.broadcast_to(last_hidden[:, None, :], (B, L, Hs))
    cat = jnp.concatenate([Hrep, enc], axis=2)                            # (B, L, H+C)
    energy = jnp.tanh(
        jnp.einsum("blk,hk->blh", cat, params["w_attn"]) + params["b_attn"])
    scores = jnp.einsum("blh,h->bl", energy, params["v"])
    attn = jax.nn.softmax(scores, axis=1)                                 # (B, L)
    ctx = jnp.einsum("bl,blc->bc", attn, enc)                             # (B, C)

    rnn_in = jnp.concatenate([we, ctx], axis=1)
    gi = rnn_in @ params["w_ih"].T + params["b_ih"]
    gh = last_hidden @ params["w_hh"].T + params["b_hh"]
    r = jax.nn.sigmoid(gi[:, :Hs] + gh[:, :Hs])
    z = jax.nn.sigmoid(gi[:, Hs:2 * Hs] + gh[:, Hs:2 * Hs])
    n = jnp.tanh(gi[:, 2 * Hs:] + r * gh[:, 2 * Hs:])
    h_new = (1.0 - z) * n + z * last_hidden

    logits = h_new @ params["w_out"].T + params["b_out"]
    if training:
        out = jax.nn.log_softmax(logits, axis=-1)
    else:
        out = jax.nn.softmax(logits, axis=-1)
    return out, h_new, attn[:, None, :]


# ----------------------------------------------------------------------------
# Deterministic parameter init (same shapes as the PyTorch __init__)
# ----------------------------------------------------------------------------
def init_params(key, hidden_size, embed_size, output_size,
                onehot_size=(8, 32)):
    cat_in = 256 + hidden_size + onehot_size[0] + onehot_size[1]
    ks = jax.random.split(key, 6)

    def linear(k, out_f, in_f):
        kw, kb = jax.random.split(k)
        bound = 1.0 / math.sqrt(in_f)
        w = jax.random.uniform(kw, (out_f, in_f), jnp.float32, -bound, bound)
        b = jax.random.uniform(kb, (out_f,), jnp.float32, -bound, bound)
        return w, b

    w_word, b_word = linear(ks[0], hidden_size, embed_size)
    w_attn, b_attn = linear(ks[1], hidden_size, cat_in)
    v = jax.random.normal(ks[2], (hidden_size,), jnp.float32) * (
        1.0 / math.sqrt(hidden_size))
    w_ih, b_ih = linear(ks[3], 3 * hidden_size, cat_in)
    w_hh, b_hh = linear(ks[4], 3 * hidden_size, hidden_size)
    w_out, b_out = linear(ks[5], output_size, hidden_size)

    return dict(
        w_word=w_word, b_word=b_word,
        w_attn=w_attn, b_attn=b_attn, v=v,
        w_ih=w_ih, b_ih=b_ih, w_hh=w_hh, b_hh=b_hh,
        w_out=w_out, b_out=b_out,
    )


if __name__ == "__main__":
    # Small shapes implied by the forward pass:
    #   hidden=32, embed=output=32 (embedding weight is eye(embed)),
    #   onehot_size=(8,32) -> encoder channel C = 256+40 = 296,
    #   spatial 4x4 -> L = 16, batch B = 2.
    hidden_size = 32
    embed_size = 32
    output_size = 32
    onehot_size = (8, 32)
    C = 256 + onehot_size[0] + onehot_size[1]
    B = 2
    L = 4 * 4

    key = jax.random.PRNGKey(0)
    kp, k1, k2, k3 = jax.random.split(key, 4)
    params = init_params(kp, hidden_size, embed_size, output_size, onehot_size)

    word_input = jax.random.randint(k1, (B,), 0, output_size, dtype=jnp.int32)
    last_hidden = jax.random.normal(k2, (B, hidden_size), jnp.float32)
    encoder_outputs = jax.random.normal(k3, (L, B, C), jnp.float32)

    for training in (False, True):
        out, h_new, attn_w = bahdanau_attn_decoder(
            word_input, last_hidden, encoder_outputs, params, training=training)
        jax.block_until_ready((out, h_new, attn_w))

        ref_out, ref_h, ref_attn = reference(
            word_input, last_hidden, encoder_outputs, params, training=training)
        np.testing.assert_allclose(np.asarray(out), np.asarray(ref_out),
                                   atol=1e-5, rtol=1e-4)
        np.testing.assert_allclose(np.asarray(h_new), np.asarray(ref_h),
                                   atol=1e-5, rtol=1e-4)
        np.testing.assert_allclose(np.asarray(attn_w), np.asarray(ref_attn),
                                   atol=1e-5, rtol=1e-4)

    print("KERNEL_OK")
</pallas_src>

<mosaic_0001>
module attributes {stable_mosaic.version = 11 : i64} {
  func.func @decoder_kernel(%arg0: memref<2xi32, #tpu.memory_space<smem>>, %arg1: memref<2x32xf32, #tpu.memory_space<vmem>>, %arg2: memref<32x296xf32, #tpu.memory_space<vmem>>, %arg3: memref<32x32xf32, #tpu.memory_space<vmem>>, %arg4: memref<1x32xf32, #tpu.memory_space<vmem>>, %arg5: memref<32x32xf32, #tpu.memory_space<vmem>>, %arg6: memref<296x32xf32, #tpu.memory_space<vmem>>, %arg7: memref<1x32xf32, #tpu.memory_space<vmem>>, %arg8: memref<1x32xf32, #tpu.memory_space<vmem>>, %arg9: memref<328x96xf32, #tpu.memory_space<vmem>>, %arg10: memref<1x96xf32, #tpu.memory_space<vmem>>, %arg11: memref<32x96xf32, #tpu.memory_space<vmem>>, %arg12: memref<1x96xf32, #tpu.memory_space<vmem>>, %arg13: memref<32x32xf32, #tpu.memory_space<vmem>>, %arg14: memref<1x32xf32, #tpu.memory_space<vmem>>, %arg15: memref<2x32xf32, #tpu.memory_space<vmem>>, %arg16: memref<2x32xf32, #tpu.memory_space<vmem>>, %arg17: memref<2x16xf32, #tpu.memory_space<vmem>>) attributes {dimension_semantics = [], scalar_prefetch = 0 : i64, scratch_operands = 0 : i64, tpu.core_type = #tpu.core_type<tc>} {
    %c0 = arith.constant 0 : index
    %c0_0 = arith.constant 0 : index
    %0 = vector.load %arg1[%c0, %c0_0] : memref<2x32xf32, #tpu.memory_space<vmem>>, vector<2x32xf32>
    %c0_1 = arith.constant 0 : index
    %1 = memref.load %arg0[%c0_1] : memref<2xi32, #tpu.memory_space<smem>>
    %2 = arith.index_cast %1 : i32 to index
    %c0_2 = arith.constant 0 : index
    %3 = vector.load %arg3[%2, %c0_2] : memref<32x32xf32, #tpu.memory_space<vmem>>, vector<1x32xf32>
    %c1 = arith.constant 1 : index
    %4 = memref.load %arg0[%c1] : memref<2xi32, #tpu.memory_space<smem>>
    %5 = arith.index_cast %4 : i32 to index
    %c0_3 = arith.constant 0 : index
    %6 = vector.load %arg3[%5, %c0_3] : memref<32x32xf32, #tpu.memory_space<vmem>>, vector<1x32xf32>
    %7 = tpu.concatenate %3, %6 in 0 : vector<1x32xf32>, vector<1x32xf32> -> vector<2x32xf32>
    %c0_4 = arith.constant 0 : index
    %c0_5 = arith.constant 0 : index
    %8 = vector.load %arg4[%c0_4, %c0_5] : memref<1x32xf32, #tpu.memory_space<vmem>>, vector<1x32xf32>
    %9 = vector.broadcast %8 : vector<1x32xf32> to vector<2x32xf32>
    %10 = arith.addf %7, %9 : vector<2x32xf32>
    %c0_6 = arith.constant 0 : index
    %c0_7 = arith.constant 0 : index
    %11 = vector.load %arg5[%c0_6, %c0_7] : memref<32x32xf32, #tpu.memory_space<vmem>>, vector<32x32xf32>
    %cst = arith.constant dense<0.000000e+00> : vector<2x32xf32>
    %12 = tpu.matmul %0, %11, %cst {dimension_numbers = #tpu.dot_dimension_numbers<[1], [0], [0], [1], [0, 0, 1, 1], [], []>} : vector<2x32xf32>, vector<32x32xf32>, vector<2x32xf32> -> vector<2x32xf32>
    %c0_8 = arith.constant 0 : index
    %c0_9 = arith.constant 0 : index
    %13 = vector.load %arg7[%c0_8, %c0_9] : memref<1x32xf32, #tpu.memory_space<vmem>>, vector<1x32xf32>
    %14 = vector.broadcast %13 : vector<1x32xf32> to vector<2x32xf32>
    %15 = arith.addf %12, %14 : vector<2x32xf32>
    %c0_10 = arith.constant 0 : index
    %c0_11 = arith.constant 0 : index
    %16 = vector.load %arg2[%c0_10, %c0_11] : memref<32x296xf32, #tpu.memory_space<vmem>>, vector<32x296xf32>
    %c0_12 = arith.constant 0 : index
    %c0_13 = arith.constant 0 : index
    %17 = vector.load %arg6[%c0_12, %c0_13] : memref<296x32xf32, #tpu.memory_space<vmem>>, vector<296x32xf32>
    %cst_14 = arith.constant dense<0.000000e+00> : vector<32x32xf32>
    %18 = tpu.matmul %16, %17, %cst_14 {dimension_numbers = #tpu.dot_dimension_numbers<[1], [0], [0], [1], [0, 0, 1, 1], [], []>} : vector<32x296xf32>, vector<296x32xf32>, vector<32x32xf32> -> vector<32x32xf32>
    %19 = vector.shape_cast %18 : vector<32x32xf32> to vector<2x16x32xf32>
    %20 = vector.shape_cast %15 : vector<2x32xf32> to vector<2x1x32xf32>
    %21 = vector.broadcast %20 : vector<2x1x32xf32> to vector<2x16x32xf32>
    %22 = arith.addf %19, %21 : vector<2x16x32xf32>
    %23 = math.tanh %22 : vector<2x16x32xf32>
    %c0_15 = arith.constant 0 : index
    %c0_16 = arith.constant 0 : index
    %24 = vector.load %arg8[%c0_15, %c0_16] : memref<1x32xf32, #tpu.memory_space<vmem>>, vector<1x32xf32>
    %25 = vector.shape_cast %24 : vector<1x32xf32> to vector<1x1x32xf32>
    %26 = vector.broadcast %25 : vector<1x1x32xf32> to vector<2x16x32xf32>
    %27 = arith.mulf %23, %26 : vector<2x16x32xf32>
    %cst_17 = arith.constant dense<0.000000e+00> : vector<2x16xf32>
    %28 = vector.multi_reduction <add>, %27, %cst_17 [2] : vector<2x16x32xf32> to vector<2x16xf32>
    %cst_18 = arith.constant dense<0xFF800000> : vector<2xf32>
    %29 = vector.multi_reduction <maximumf>, %28, %cst_18 [1] : vector<2x16xf32> to vector<2xf32>
    %30 = vector.shape_cast %29 : vector<2xf32> to vector<2x1xf32>
    %31 = vector.broadcast %30 : vector<2x1xf32> to vector<2x16xf32>
    %32 = arith.subf %28, %31 : vector<2x16xf32>
    %33 = math.exp %32 : vector<2x16xf32>
    %cst_19 = arith.constant dense<0.000000e+00> : vector<2xf32>
    %34 = vector.multi_reduction <add>, %33, %cst_19 [1] : vector<2x16xf32> to vector<2xf32>
    %35 = vector.shape_cast %34 : vector<2xf32> to vector<2x1xf32>
    %36 = vector.broadcast %35 : vector<2x1xf32> to vector<2x16xf32>
    %37 = arith.divf %33, %36 : vector<2x16xf32>
    %c0_20 = arith.constant 0 : index
    %c0_21 = arith.constant 0 : index
    %38 = vector.load %arg17[%c0_20, %c0_21] : memref<2x16xf32, #tpu.memory_space<vmem>>, vector<2x16xf32>
    tpu.vector_store %arg17[%c0_20, %c0_21], %37 {strides = array<i32>} : memref<2x16xf32, #tpu.memory_space<vmem>>, vector<2x16xf32>,
    %39 = vector.extract_strided_slice %37 {offsets = [0, 0], sizes = [1, 16], strides = [1, 1]} : vector<2x16xf32> to vector<1x16xf32>
    %c0_22 = arith.constant 0 : index
    %c0_23 = arith.constant 0 : index
    %40 = vector.load %arg2[%c0_22, %c0_23] : memref<32x296xf32, #tpu.memory_space<vmem>>, vector<16x296xf32>
    %cst_24 = arith.constant dense<0.000000e+00> : vector<1x296xf32>
    %41 = tpu.matmul %39, %40, %cst_24 {dimension_numbers = #tpu.dot_dimension_numbers<[1], [0], [0], [1], [0, 0, 1, 1], [], []>} : vector<1x16xf32>, vector<16x296xf32>, vector<1x296xf32> -> vector<1x296xf32>
    %42 = vector.extract_strided_slice %37 {offsets = [1, 0], sizes = [1, 16], strides = [1, 1]} : vector<2x16xf32> to vector<1x16xf32>
    %c16 = arith.constant 16 : index
    %c0_25 = arith.constant 0 : index
    %43 = vector.load %arg2[%c16, %c0_25] : memref<32x296xf32, #tpu.memory_space<vmem>>, vector<16x296xf32>
    %cst_26 = arith.constant dense<0.000000e+00> : vector<1x296xf32>
    %44 = tpu.matmul %42, %43, %cst_26 {dimension_numbers = #tpu.dot_dimension_numbers<[1], [0], [0], [1], [0, 0, 1, 1], [], []>} : vector<1x16xf32>, vector<16x296xf32>, vector<1x296xf32> -> vector<1x296xf32>
    %45 = tpu.concatenate %41, %44 in 0 : vector<1x296xf32>, vector<1x296xf32> -> vector<2x296xf32>
    %46 = tpu.concatenate %10, %45 in 1 : vector<2x32xf32>, vector<2x296xf32> -> vector<2x328xf32>
    %c0_27 = arith.constant 0 : index
    %c0_28 = arith.constant 0 : index
    %47 = vector.load %arg9[%c0_27, %c0_28] : memref<328x96xf32, #tpu.memory_space<vmem>>, vector<328x96xf32>
    %cst_29 = arith.constant dense<0.000000e+00> : vector<2x96xf32>
    %48 = tpu.matmul %46, %47, %cst_29 {dimension_numbers = #tpu.dot_dimension_numbers<[1], [0], [0], [1], [0, 0, 1, 1], [], []>} : vector<2x328xf32>, vector<328x96xf32>, vector<2x96xf32> -> vector<2x96xf32>
    %c0_30 = arith.constant 0 : index
    %c0_31 = arith.constant 0 : index
    %49 = vector.load %arg10[%c0_30, %c0_31] : memref<1x96xf32, #tpu.memory_space<vmem>>, vector<1x96xf32>
    %50 = vector.broadcast %49 : vector<1x96xf32> to vector<2x96xf32>
    %51 = arith.addf %48, %50 : vector<2x96xf32>
    %c0_32 = arith.constant 0 : index
    %c0_33 = arith.constant 0 : index
    %52 = vector.load %arg11[%c0_32, %c0_33] : memref<32x96xf32, #tpu.memory_space<vmem>>, vector<32x96xf32>
    %cst_34 = arith.constant dense<0.000000e+00> : vector<2x96xf32>
    %53 = tpu.matmul %0, %52, %cst_34 {dimension_numbers = #tpu.dot_dimension_numbers<[1], [0], [0], [1], [0, 0, 1, 1], [], []>} : vector<2x32xf32>, vector<32x96xf32>, vector<2x96xf32> -> vector<2x96xf32>
    %c0_35 = arith.constant 0 : index
    %c0_36 = arith.constant 0 : index
    %54 = vector.load %arg12[%c0_35, %c0_36] : memref<1x96xf32, #tpu.memory_space<vmem>>, vector<1x96xf32>
    %55 = vector.broadcast %54 : vector<1x96xf32> to vector<2x96xf32>
    %56 = arith.addf %53, %55 : vector<2x96xf32>
    %57 = vector.extract_strided_slice %51 {offsets = [0, 0], sizes = [2, 32], strides = [1, 1]} : vector<2x96xf32> to vector<2x32xf32>
    %58 = vector.extract_strided_slice %56 {offsets = [0, 0], sizes = [2, 32], strides = [1, 1]} : vector<2x96xf32> to vector<2x32xf32>
    %59 = arith.addf %57, %58 : vector<2x32xf32>
    %60 = arith.negf %59 : vector<2x32xf32>
    %61 = math.exp %60 : vector<2x32xf32>
    %cst_37 = arith.constant 1.000000e+00 : f32
    %62 = vector.broadcast %cst_37 : f32 to vector<2x32xf32>
    %63 = arith.addf %62, %61 : vector<2x32xf32>
    %64 = arith.divf %62, %63 : vector<2x32xf32>
    %65 = vector.extract_strided_slice %51 {offsets = [0, 32], sizes = [2, 32], strides = [1, 1]} : vector<2x96xf32> to vector<2x32xf32>
    %66 = vector.extract_strided_slice %56 {offsets = [0, 32], sizes = [2, 32], strides = [1, 1]} : vector<2x96xf32> to vector<2x32xf32>
    %67 = arith.addf %65, %66 : vector<2x32xf32>
    %68 = arith.negf %67 : vector<2x32xf32>
    %69 = math.exp %68 : vector<2x32xf32>
    %cst_38 = arith.constant 1.000000e+00 : f32
    %70 = vector.broadcast %cst_38 : f32 to vector<2x32xf32>
    %71 = arith.addf %70, %69 : vector<2x32xf32>
    %72 = arith.divf %70, %71 : vector<2x32xf32>
    %73 = vector.extract_strided_slice %51 {offsets = [0, 64], sizes = [2, 32], strides = [1, 1]} : vector<2x96xf32> to vector<2x32xf32>
    %74 = vector.extract_strided_slice %56 {offsets = [0, 64], sizes = [2, 32], strides = [1, 1]} : vector<2x96xf32> to vector<2x32xf32>
    %75 = arith.mulf %64, %74 : vector<2x32xf32>
    %76 = arith.addf %73, %75 : vector<2x32xf32>
    %77 = math.tanh %76 : vector<2x32xf32>
    %cst_39 = arith.constant 1.000000e+00 : f32
    %78 = vector.broadcast %cst_39 : f32 to vector<2x32xf32>
    %79 = arith.subf %78, %72 : vector<2x32xf32>
    %80 = arith.mulf %79, %77 : vector<2x32xf32>
    %81 = arith.mulf %72, %0 : vector<2x32xf32>
    %82 = arith.addf %80, %81 : vector<2x32xf32>
    %c0_40 = arith.constant 0 : index
    %c0_41 = arith.constant 0 : index
    %83 = vector.load %arg16[%c0_40, %c0_41] : memref<2x32xf32, #tpu.memory_space<vmem>>, vector<2x32xf32>
    tpu.vector_store %arg16[%c0_40, %c0_41], %82 {strides = array<i32>} : memref<2x32xf32, #tpu.memory_space<vmem>>, vector<2x32xf32>,
    %c0_42 = arith.constant 0 : index
    %c0_43 = arith.constant 0 : index
    %84 = vector.load %arg13[%c0_42, %c0_43] : memref<32x32xf32, #tpu.memory_space<vmem>>, vector<32x32xf32>
    %cst_44 = arith.constant dense<0.000000e+00> : vector<2x32xf32>
    %85 = tpu.matmul %82, %84, %cst_44 {dimension_numbers = #tpu.dot_dimension_numbers<[1], [0], [0], [1], [0, 0, 1, 1], [], []>} : vector<2x32xf32>, vector<32x32xf32>, vector<2x32xf32> -> vector<2x32xf32>
    %c0_45 = arith.constant 0 : index
    %c0_46 = arith.constant 0 : index
    %86 = vector.load %arg14[%c0_45, %c0_46] : memref<1x32xf32, #tpu.memory_space<vmem>>, vector<1x32xf32>
    %87 = vector.broadcast %86 : vector<1x32xf32> to vector<2x32xf32>
    %88 = arith.addf %85, %87 : vector<2x32xf32>
    %cst_47 = arith.constant dense<0xFF800000> : vector<2xf32>
    %89 = vector.multi_reduction <maximumf>, %88, %cst_47 [1] : vector<2x32xf32> to vector<2xf32>
    %90 = vector.shape_cast %89 : vector<2xf32> to vector<2x1xf32>
    %91 = vector.broadcast %90 : vector<2x1xf32> to vector<2x32xf32>
    %92 = arith.subf %88, %91 : vector<2x32xf32>
    %93 = math.exp %92 : vector<2x32xf32>
    %cst_48 = arith.constant dense<0.000000e+00> : vector<2xf32>
    %94 = vector.multi_reduction <add>, %93, %cst_48 [1] : vector<2x32xf32> to vector<2xf32>
    %95 = vector.shape_cast %94 : vector<2xf32> to vector<2x1xf32>
    %96 = vector.broadcast %95 : vector<2x1xf32> to vector<2x32xf32>
    %97 = arith.divf %93, %96 : vector<2x32xf32>
    %c0_49 = arith.constant 0 : index
    %c0_50 = arith.constant 0 : index
    %98 = vector.load %arg15[%c0_49, %c0_50] : memref<2x32xf32, #tpu.memory_space<vmem>>, vector<2x32xf32>
    tpu.vector_store %arg15[%c0_49, %c0_50], %97 {strides = array<i32>} : memref<2x32xf32, #tpu.memory_space<vmem>>, vector<2x32xf32>,
    return
  }
}

</mosaic_0001>

<llo_original>
// kernel: tpu_custom_call.1
$region0: #{tpu_custom_call.1}
  #allocation0 [shape = 'u32[]', space=smem, size = 0x4, offset = 0x4, fixed_abs, tag = 'smem constant byte address 0x4 - core index']
  #allocation1 [shape = 'u32[144,128]{1,0:T(1,128)}', space=vmem, size = 0x12000, scoped, tag = 'internal scratch']
  %s0 = inlined_call_operand.vmem [shape: s32[2], index: 0, kind: input, shape index: {}]
  %s1 = inlined_call_operand.vmem [shape: f32[2,32], index: 1, kind: input, shape index: {}]
  %s2 = inlined_call_operand.vmem [shape: f32[32,296], index: 2, kind: input, shape index: {}]
  %s3 = inlined_call_operand.vmem [shape: f32[32,32], index: 3, kind: input, shape index: {}]
  %s4 = inlined_call_operand.vmem [shape: f32[1,32], index: 4, kind: input, shape index: {}]
  %s5 = inlined_call_operand.vmem [shape: f32[32,32], index: 5, kind: input, shape index: {}]
  %s6 = inlined_call_operand.vmem [shape: f32[296,32], index: 6, kind: input, shape index: {}]
  %s7 = inlined_call_operand.vmem [shape: f32[1,32], index: 7, kind: input, shape index: {}]
  %s8 = inlined_call_operand.vmem [shape: f32[1,32], index: 8, kind: input, shape index: {}]
  %s9 = inlined_call_operand.vmem [shape: f32[328,96], index: 9, kind: input, shape index: {}]
  %s10 = inlined_call_operand.vmem [shape: f32[1,96], index: 10, kind: input, shape index: {}]
  %s11 = inlined_call_operand.vmem [shape: f32[32,96], index: 11, kind: input, shape index: {}]
  %s12 = inlined_call_operand.vmem [shape: f32[1,96], index: 12, kind: input, shape index: {}]
  %s13 = inlined_call_operand.vmem [shape: f32[32,32], index: 13, kind: input, shape index: {}]
  %s14 = inlined_call_operand.vmem [shape: f32[1,32], index: 14, kind: input, shape index: {}]
  %s15 = inlined_call_operand.hbm [shape: f32[2,32], index: 15, kind: output, shape index: {0}]
  %s16 = inlined_call_operand.hbm [shape: f32[2,32], index: 16, kind: output, shape index: {1}]
  %s17 = inlined_call_operand.hbm [shape: f32[2,16], index: 17, kind: output, shape index: {2}]
  %18 = xla_tuple %s15, %s16, %s17
  %s19 = sld [smem:[#allocation0]]
  $region90: #{tpu_custom_call.1} parent=0
    _
  %s21 = ssub.s32 1, %s19
  %s22 = scalar_select 0, %s21, %s19
  $region1: #{tpu_custom_call.1} parent=0
    #allocation2 [shape = 'u8[512]{0}', space=smem, size = 0x200, scoped, tag = 'input window, operand 0, single buffered']
    #allocation3 [shape = 's32[1]{0}', space=sflag, size = 0x4, scoped, tag = 'scoped memory for tpu_custom_call.1']
    #allocation4 [shape = 's32[1]{0}', space=sflag, size = 0x4, scoped, tag = 'scoped memory for tpu_custom_call.1']
    #allocation5 [shape = 'u8[1024]{0}', space=vmem, size = 0x400, scoped, tag = 'output window, operand 0, single buffered']
    #allocation6 [shape = 'u8[1024]{0}', space=vmem, size = 0x400, scoped, tag = 'output window, operand 1, single buffered']
    #allocation7 [shape = 's32[1]{0}', space=sflag, size = 0x4, scoped, tag = 'scoped memory for tpu_custom_call.1']
    #allocation8 [shape = 'u8[1024]{0}', space=vmem, size = 0x400, scoped, tag = 'output window, operand 2, single buffered']
    %23 = vsyncpa [#allocation4], 0
    %24 = vsyncpa [#allocation3], 0
    %25 = vsyncpa [#allocation7], 0
    // Predicated region
    $region2: #{tpu_custom_call.1} parent=1 // pred_check
      _
    $region3: #{tpu_custom_call.1} parent=1 // pred_check_branch
      %27 = sbr.rel (0) target = $region5
    $region4: #{tpu_custom_call.1} parent=1 // pred_region
      %s29 = ssub.s32 16, 16
      %30 = vsyncadd [#allocation4], %s29
      %s32 = sshll.u32 %s0, 4
      %s33 = int_to_ptr.vmem [resolvable:$true] %s32
      %35 = dma.vmem_to_smem %s33, 16, [#allocation2], [#allocation4]
    $region5: #{tpu_custom_call.1} parent=1 // pred_fallthru
      _
    // Predicated region
    $region6: #{tpu_custom_call.1} parent=1 // pred_check
      _
    $region7: #{tpu_custom_call.1} parent=1 // pred_check_branch
      %37 = sbr.rel (0) target = $region9
    $region8: #{tpu_custom_call.1} parent=1 // pred_region
      _
    $region9: #{tpu_custom_call.1} parent=1 // pred_fallthru
      _
    // Predicated region
    $region10: #{tpu_custom_call.1} parent=1 // pred_check
      _
    $region11: #{tpu_custom_call.1} parent=1 // pred_check_branch
      %39 = sbr.rel (0) target = $region13
    $region12: #{tpu_custom_call.1} parent=1 // pred_region
      _
    $region13: #{tpu_custom_call.1} parent=1 // pred_fallthru
      _
    // Predicated region
    $region14: #{tpu_custom_call.1} parent=1 // pred_check
      _
    $region15: #{tpu_custom_call.1} parent=1 // pred_check_branch
      %41 = sbr.rel (0) target = $region17
    $region16: #{tpu_custom_call.1} parent=1 // pred_region
      _
    $region17: #{tpu_custom_call.1} parent=1 // pred_fallthru
      _
    // Predicated region
    $region18: #{tpu_custom_call.1} parent=1 // pred_check
      _
    $region19: #{tpu_custom_call.1} parent=1 // pred_check_branch
      %43 = sbr.rel (0) target = $region21
    $region20: #{tpu_custom_call.1} parent=1 // pred_region
      _
    $region21: #{tpu_custom_call.1} parent=1 // pred_fallthru
      _
    // Predicated region
    $region22: #{tpu_custom_call.1} parent=1 // pred_check
      _
    $region23: #{tpu_custom_call.1} parent=1 // pred_check_branch
      %45 = sbr.rel (0) target = $region25
    $region24: #{tpu_custom_call.1} parent=1 // pred_region
      _
    $region25: #{tpu_custom_call.1} parent=1 // pred_fallthru
      _
    // Predicated region
    $region26: #{tpu_custom_call.1} parent=1 // pred_check
      _
    $region27: #{tpu_custom_call.1} parent=1 // pred_check_branch
      %47 = sbr.rel (0) target = $region29
    $region28: #{tpu_custom_call.1} parent=1 // pred_region
      _
    $region29: #{tpu_custom_call.1} parent=1 // pred_fallthru
      _
    // Predicated region
    $region30: #{tpu_custom_call.1} parent=1 // pred_check
      _
    $region31: #{tpu_custom_call.1} parent=1 // pred_check_branch
      %49 = sbr.rel (0) target = $region33
    $region32: #{tpu_custom_call.1} parent=1 // pred_region
      _
    $region33: #{tpu_custom_call.1} parent=1 // pred_fallthru
      _
    // Predicated region
    $region34: #{tpu_custom_call.1} parent=1 // pred_check
      _
    $region35: #{tpu_custom_call.1} parent=1 // pred_check_branch
      %51 = sbr.rel (0) target = $region37
    $region36: #{tpu_custom_call.1} parent=1 // pred_region
      _
    $region37: #{tpu_custom_call.1} parent=1 // pred_fallthru
      _
    // Predicated region
    $region38: #{tpu_custom_call.1} parent=1 // pred_check
      _
    $region39: #{tpu_custom_call.1} parent=1 // pred_check_branch
      %53 = sbr.rel (0) target = $region41
    $region40: #{tpu_custom_call.1} parent=1 // pred_region
      _
    $region41: #{tpu_custom_call.1} parent=1 // pred_fallthru
      _
    // Predicated region
    $region42: #{tpu_custom_call.1} parent=1 // pred_check
      _
    $region43: #{tpu_custom_call.1} parent=1 // pred_check_branch
      %55 = sbr.rel (0) target = $region45
    $region44: #{tpu_custom_call.1} parent=1 // pred_region
      _
    $region45: #{tpu_custom_call.1} parent=1 // pred_fallthru
      _
    // Predicated region
    $region46: #{tpu_custom_call.1} parent=1 // pred_check
      _
    $region47: #{tpu_custom_call.1} parent=1 // pred_check_branch
      %57 = sbr.rel (0) target = $region49
    $region48: #{tpu_custom_call.1} parent=1 // pred_region
      _
    $region49: #{tpu_custom_call.1} parent=1 // pred_fallthru
      _
    // Predicated region
    $region50: #{tpu_custom_call.1} parent=1 // pred_check
      _
    $region51: #{tpu_custom_call.1} parent=1 // pred_check_branch
      %59 = sbr.rel (0) target = $region53
    $region52: #{tpu_custom_call.1} parent=1 // pred_region
      _
    $region53: #{tpu_custom_call.1} parent=1 // pred_fallthru
      _
    // Predicated region
    $region54: #{tpu_custom_call.1} parent=1 // pred_check
      _
    $region55: #{tpu_custom_call.1} parent=1 // pred_check_branch
      %61 = sbr.rel (0) target = $region57
    $region56: #{tpu_custom_call.1} parent=1 // pred_region
      _
    $region57: #{tpu_custom_call.1} parent=1 // pred_fallthru
      _
    // Predicated region
    $region58: #{tpu_custom_call.1} parent=1 // pred_check
      _
    $region59: #{tpu_custom_call.1} parent=1 // pred_check_branch
      %63 = sbr.rel (0) target = $region61
    $region60: #{tpu_custom_call.1} parent=1 // pred_region
      _
    $region61: #{tpu_custom_call.1} parent=1 // pred_fallthru
      _
    // Predicated region
    $region62: #{tpu_custom_call.1} parent=1 // pred_check
      _
    $region63: #{tpu_custom_call.1} parent=1 // pred_check_branch
      %65 = sbr.rel (0) target = $region65
    $region64: #{tpu_custom_call.1} parent=1 // pred_region
      %66 = dma.done [#allocation4], 16
    $region65: #{tpu_custom_call.1} parent=1 // pred_fallthru
      _
    %67 = sfence
    %v68 = vld [vmem:[%s1] sm:$0x3]
    %s69 = sld [smem:[#allocation2]]
    %s70 = scalar_lea.vmem %s3, %s69
    %v71 = vld [vmem:[%s70] sm:$0x1]
    %s72 = sld [smem:[#allocation2 + $0x1]]
    %s73 = scalar_lea.vmem %s3, %s72
    %v74 = vld [vmem:[%s73] sm:$0x1]
    %v76 = vrot.slane %v74, 7
    %vm78 = vcmask 1040384
    %v79 = vsel %vm78, %v71, %v76
    %v80 = vld [vmem:[%s4] sm:$0x1]
    %v82 = vlaneseq
    %v83 = vshrl.u32 %v82, 7
    %v84 = vsub.s32 0, %v83
    %v85 = vrot.slane %v80, %v84
    %v87 = vadd.f32 %v79, %v85
    %v88 = vld [vmem:[%s5] sm:$0xff]
    %v89 = vld [vmem:[%s5 + $0x8] sm:$0xff]
    %v90 = vld [vmem:[%s5 + $0x10] sm:$0xff]
    %v91 = vld [vmem:[%s5 + $0x18] sm:$0xff]
    %v92 = vld [vmem:[%s7] sm:$0x1]
    %v94 = vlaneseq
    %v95 = vshrl.u32 %v94, 7
    %v96 = vsub.s32 0, %v95
    %v97 = vrot.slane %v92, %v96
    %vm99 = vcmask 261120
    %v101 = vsel %vm99, %v68, 0
    %103 = vmatprep.subr.mxu0 0.0
    %104 = vmatpush1.msra.mxu0 %v88
    %105 = vmatprep.subr.mxu0 0.0
    %106 = vmatpush1.msra.mxu0 %v89
    %107 = vmatprep.subr.mxu0 0.0
    %108 = vmatpush1.msra.mxu0 %v90
    %109 = vmatprep.subr.mxu0 0.0
    %110 = vmatpush1.msra.mxu0 %v91
    %111 = vmatprep.subr.mxu0 0.0
    %112 = vmatpush1.msra.mxu0 0.0
    %113 = vmatprep.subr.mxu0 0.0
    %114 = vmatpush1.msra.mxu0 0.0
    %115 = vmatprep.subr.mxu0 0.0
    %116 = vmatpush1.msra.mxu0 0.0
    %117 = vmatprep.subr.mxu0 0.0
    %118 = vmatpush1.msra.mxu0 0.0
    %119 = vmatprep.subr.mxu0 0.0
    %120 = vmatpush1.msra.mxu0 0.0
    %121 = vmatprep.subr.mxu0 0.0
    %122 = vmatpush1.msra.mxu0 0.0
    %123 = vmatprep.subr.mxu0 0.0
    %124 = vmatpush1.msra.mxu0 0.0
    %125 = vmatprep.subr.mxu0 0.0
    %126 = vmatpush1.msra.mxu0 0.0
    %127 = vmatprep.subr.mxu0 0.0
    %128 = vmatpush1.msra.mxu0 0.0
    %129 = vmatprep.subr.mxu0 0.0
    %130 = vmatpush1.msra.mxu0 0.0
    %131 = vmatprep.subr.mxu0 0.0
    %132 = vmatpush1.msra.mxu0 0.0
    %133 = vmatprep.subr.mxu0 0.0
    %134 = vmatpush1.msra.mxu0 0.0
    %135 = vmatprep.subr.mxu0 0.0
    %136 = vmatpush1.msra.mxu0 0.0
    %137 = vmatprep.subr.mxu0 0.0
    %138 = vmatpush1.msra.mxu0 0.0
    %139 = vmatprep.subr.mxu0 0.0
    %140 = vmatpush1.msra.mxu0 0.0
    %141 = vmatprep.subr.mxu0 0.0
    %142 = vmatpush1.msra.mxu0 0.0
    %143 = vmatprep.subr.mxu0 0.0
    %144 = vmatpush1.msra.mxu0 0.0
    %145 = vmatprep.subr.mxu0 0.0
    %146 = vmatpush1.msra.mxu0 0.0
    %147 = vmatprep.subr.mxu0 0.0
    %148 = vmatpush1.msra.mxu0 0.0
    %149 = vmatprep.subr.mxu0 0.0
    %150 = vmatpush1.msra.mxu0 0.0
    %151 = vmatprep.subr.mxu0 0.0
    %152 = vmatpush1.msra.mxu0 0.0
    %153 = vmatprep.subr.mxu0 0.0
    %154 = vmatpush1.msra.mxu0 0.0
    %155 = vmatprep.subr.mxu0 0.0
    %156 = vmatpush1.msra.mxu0 0.0
    %157 = vmatprep.subr.mxu0 0.0
    %158 = vmatpush1.msra.mxu0 0.0
    %159 = vmatprep.subr.mxu0 0.0
    %160 = vmatpush1.msra.mxu0 0.0
    %161 = vmatprep.subr.mxu0 0.0
    %162 = vmatpush1.msra.mxu0 0.0
    %163 = vmatprep.subr.mxu0 0.0
    %164 = vmatpush1.msra.mxu0 0.0
    %165 = vmatprep.subr.mxu0 0.0
    %166 = vmatpush1.msra.mxu0 0.0
    %167 = vmatprep.mubr.f32.mxu0 0.0
    %168 = vmatmul.mubr.f32.gmra.mrb[0].mxu0 %v101
    %v169 = vpop.f32.mrb[0].mxu0
    %v170 = vadd.f32 %v97, %v169
    %v171 = vpop.f32.mrb[0].mxu0
    %172 = vdwg.mxu0
    %v173 = vld [vmem:[%s2] sm:$0xff]
    %v174 = vld [vmem:[%s2 + $0x8] sm:$0xff]
    %v175 = vld [vmem:[%s2 + $0x10] sm:$0xff]
    %v176 = vld [vmem:[%s2 + $0x18] sm:$0xff]
    %v177 = vld [vmem:[%s2 + $0x20] sm:$0xff]
    %v178 = vld [vmem:[%s2 + $0x28] sm:$0xff]
    %v179 = vld [vmem:[%s2 + $0x30] sm:$0xff]
    %v180 = vld [vmem:[%s2 + $0x38] sm:$0xff]
    %v181 = vld [vmem:[%s2 + $0x40] sm:$0xff]
    %v182 = vld [vmem:[%s2 + $0x48] sm:$0xff]
    %v183 = vld [vmem:[%s2 + $0x50] sm:$0xff]
    %v184 = vld [vmem:[%s2 + $0x58] sm:$0xff]
    %v185 = vld [vmem:[%s6] sm:$0xff]
    %v186 = vld [vmem:[%s6 + $0x8] sm:$0xff]
    %v187 = vld [vmem:[%s6 + $0x10] sm:$0xff]
    %v188 = vld [vmem:[%s6 + $0x18] sm:$0xff]
    %v189 = vld [vmem:[%s6 + $0x20] sm:$0xff]
    %v190 = vld [vmem:[%s6 + $0x28] sm:$0xff]
    %v191 = vld [vmem:[%s6 + $0x30] sm:$0xff]
    %v192 = vld [vmem:[%s6 + $0x38] sm:$0xff]
    %v193 = vld [vmem:[%s6 + $0x40] sm:$0xff]
    %v194 = vld [vmem:[%s6 + $0x48] sm:$0xff]
    %v195 = vld [vmem:[%s6 + $0x50] sm:$0xff]
    %v196 = vld [vmem:[%s6 + $0x58] sm:$0xff]
    %v197 = vld [vmem:[%s6 + $0x60] sm:$0xff]
    %v198 = vld [vmem:[%s6 + $0x68] sm:$0xff]
    %v199 = vld [vmem:[%s6 + $0x70] sm:$0xff]
    %v200 = vld [vmem:[%s6 + $0x78] sm:$0xff]
    %v201 = vld [vmem:[%s6 + $0x80] sm:$0xff]
    %v202 = vld [vmem:[%s6 + $0x88] sm:$0xff]
    %v203 = vld [vmem:[%s6 + $0x90] sm:$0xff]
    %v204 = vld [vmem:[%s6 + $0x98] sm:$0xff]
    %v205 = vld [vmem:[%s6 + $0xa0] sm:$0xff]
    %v206 = vld [vmem:[%s6 + $0xa8] sm:$0xff]
    %v207 = vld [vmem:[%s6 + $0xb0] sm:$0xff]
    %v208 = vld [vmem:[%s6 + $0xb8] sm:$0xff]
    %v209 = vld [vmem:[%s6 + $0xc0] sm:$0xff]
    %v210 = vld [vmem:[%s6 + $0xc8] sm:$0xff]
    %v211 = vld [vmem:[%s6 + $0xd0] sm:$0xff]
    %v212 = vld [vmem:[%s6 + $0xd8] sm:$0xff]
    %v213 = vld [vmem:[%s6 + $0xe0] sm:$0xff]
    %v214 = vld [vmem:[%s6 + $0xe8] sm:$0xff]
    %v215 = vld [vmem:[%s6 + $0xf0] sm:$0xff]
    %v216 = vld [vmem:[%s6 + $0xf8] sm:$0xff]
    %v217 = vld [vmem:[%s6 + $0x100] sm:$0xff]
    %v218 = vld [vmem:[%s6 + $0x108] sm:$0xff]
    %v219 = vld [vmem:[%s6 + $0x110] sm:$0xff]
    %v220 = vld [vmem:[%s6 + $0x118] sm:$0xff]
    %v221 = vld [vmem:[%s6 + $0x120] sm:$0xff]
    %vm222 = vcmask 326656
    %v224 = vsel %vm222, %v175, 0
    %v227 = vsel %vm222, %v178, 0
    %v230 = vsel %vm222, %v181, 0
    %v233 = vsel %vm222, %v184, 0
    %235 = vmatprep.subr.mxu0 0.0
    %236 = vmatpush1.msra.mxu0 %v185
    %237 = vmatprep.subr.mxu0 0.0
    %238 = vmatpush1.msra.mxu0 %v186
    %239 = vmatprep.subr.mxu0 0.0
    %240 = vmatpush1.msra.mxu0 %v187
    %241 = vmatprep.subr.mxu0 0.0
    %242 = vmatpush1.msra.mxu0 %v188
    %243 = vmatprep.subr.mxu0 0.0
    %244 = vmatpush1.msra.mxu0 %v189
    %245 = vmatprep.subr.mxu0 0.0
    %246 = vmatpush1.msra.mxu0 %v190
    %247 = vmatprep.subr.mxu0 0.0
    %248 = vmatpush1.msra.mxu0 %v191
    %249 = vmatprep.subr.mxu0 0.0
    %250 = vmatpush1.msra.mxu0 %v192
    %251 = vmatprep.subr.mxu0 0.0
    %252 = vmatpush1.msra.mxu0 %v193
    %253 = vmatprep.subr.mxu0 0.0
    %254 = vmatpush1.msra.mxu0 %v194
    %255 = vmatprep.subr.mxu0 0.0
    %256 = vmatpush1.msra.mxu0 %v195
    %257 = vmatprep.subr.mxu0 0.0
    %258 = vmatpush1.msra.mxu0 %v196
    %259 = vmatprep.subr.mxu0 0.0
    %260 = vmatpush1.msra.mxu0 %v197
    %261 = vmatprep.subr.mxu0 0.0
    %262 = vmatpush1.msra.mxu0 %v198
    %263 = vmatprep.subr.mxu0 0.0
    %264 = vmatpush1.msra.mxu0 %v199
    %265 = vmatprep.subr.mxu0 0.0
    %266 = vmatpush1.msra.mxu0 %v200
    %267 = vmatprep.subr.mxu0 0.0
    %268 = vmatpush1.msra.mxu0 %v201
    %269 = vmatprep.subr.mxu0 0.0
    %270 = vmatpush1.msra.mxu0 %v202
    %271 = vmatprep.subr.mxu0 0.0
    %272 = vmatpush1.msra.mxu0 %v203
    %273 = vmatprep.subr.mxu0 0.0
    %274 = vmatpush1.msra.mxu0 %v204
    %275 = vmatprep.subr.mxu0 0.0
    %276 = vmatpush1.msra.mxu0 %v205
    %277 = vmatprep.subr.mxu0 0.0
    %278 = vmatpush1.msra.mxu0 %v206
    %279 = vmatprep.subr.mxu0 0.0
    %280 = vmatpush1.msra.mxu0 %v207
    %281 = vmatprep.subr.mxu0 0.0
    %282 = vmatpush1.msra.mxu0 %v208
    %283 = vmatprep.subr.mxu0 0.0
    %284 = vmatpush1.msra.mxu0 %v209
    %285 = vmatprep.subr.mxu0 0.0
    %286 = vmatpush1.msra.mxu0 %v210
    %287 = vmatprep.subr.mxu0 0.0
    %288 = vmatpush1.msra.mxu0 %v211
    %289 = vmatprep.subr.mxu0 0.0
    %290 = vmatpush1.msra.mxu0 %v212
    %291 = vmatprep.subr.mxu0 0.0
    %292 = vmatpush1.msra.mxu0 %v213
    %293 = vmatprep.subr.mxu0 0.0
    %294 = vmatpush1.msra.mxu0 %v214
    %295 = vmatprep.subr.mxu0 0.0
    %296 = vmatpush1.msra.mxu0 %v215
    %297 = vmatprep.subr.mxu0 0.0
    %298 = vmatpush1.msra.mxu0 %v216
    %299 = vmatprep.mubr.f32.mxu0 %v174
    %300 = vmatmul.mubr.f32.gmra.mrb[0].mxu0 %v173
    %v301 = vpop.f32.mrb[0].mxu0
    %v302 = vadd.f32 0.0, %v301
    %v303 = vpop.f32.mrb[0].mxu0
    %304 = vmatprep.mubr.f32.mxu0 %v177
    %305 = vmatmul.mubr.f32.gmra.mrb[0].mxu0 %v176
    %v306 = vpop.f32.mrb[0].mxu0
    %v307 = vadd.f32 0.0, %v306
    %v308 = vpop.f32.mrb[0].mxu0
    %309 = vmatprep.mubr.f32.mxu0 %v180
    %310 = vmatmul.mubr.f32.gmra.mrb[0].mxu0 %v179
    %v311 = vpop.f32.mrb[0].mxu0
    %v312 = vadd.f32 0.0, %v311
    %v313 = vpop.f32.mrb[0].mxu0
    %314 = vmatprep.mubr.f32.mxu0 %v183
    %315 = vmatmul.mubr.f32.gmra.mrb[0].mxu0 %v182
    %v316 = vpop.f32.mrb[0].mxu0
    %v317 = vadd.f32 0.0, %v316
    %v318 = vpop.f32.mrb[0].mxu0
    %319 = vdwg.mxu0
    %320 = vmatprep.subr.mxu0 0.0
    %321 = vmatpush1.msra.mxu0 %v217
    %322 = vmatprep.subr.mxu0 0.0
    %323 = vmatpush1.msra.mxu0 %v218
    %324 = vmatprep.subr.mxu0 0.0
    %325 = vmatpush1.msra.mxu0 %v219
    %326 = vmatprep.subr.mxu0 0.0
    %327 = vmatpush1.msra.mxu0 %v220
    %328 = vmatprep.subr.mxu0 0.0
    %329 = vmatpush1.msra.mxu0 %v221
    %330 = vmatprep.subr.mxu0 0.0
    %331 = vmatpush1.msra.mxu0 0.0
    %332 = vmatprep.subr.mxu0 0.0
    %333 = vmatpush1.msra.mxu0 0.0
    %334 = vmatprep.subr.mxu0 0.0
    %335 = vmatpush1.msra.mxu0 0.0
    %336 = vmatprep.subr.mxu0 0.0
    %337 = vmatpush1.msra.mxu0 0.0
    %338 = vmatprep.subr.mxu0 0.0
    %339 = vmatpush1.msra.mxu0 0.0
    %340 = vmatprep.subr.mxu0 0.0
    %341 = vmatpush1.msra.mxu0 0.0
    %342 = vmatprep.subr.mxu0 0.0
    %343 = vmatpush1.msra.mxu0 0.0
    %344 = vmatprep.subr.mxu0 0.0
    %345 = vmatpush1.msra.mxu0 0.0
    %346 = vmatprep.subr.mxu0 0.0
    %347 = vmatpush1.msra.mxu0 0.0
    %348 = vmatprep.subr.mxu0 0.0
    %349 = vmatpush1.msra.mxu0 0.0
    %350 = vmatprep.subr.mxu0 0.0
    %351 = vmatpush1.msra.mxu0 0.0
    %352 = vmatprep.subr.mxu0 0.0
    %353 = vmatpush1.msra.mxu0 0.0
    %354 = vmatprep.subr.mxu0 0.0
    %355 = vmatpush1.msra.mxu0 0.0
    %356 = vmatprep.subr.mxu0 0.0
    %357 = vmatpush1.msra.mxu0 0.0
    %358 = vmatprep.subr.mxu0 0.0
    %359 = vmatpush1.msra.mxu0 0.0
    %360 = vmatprep.subr.mxu0 0.0
    %361 = vmatpush1.msra.mxu0 0.0
    %362 = vmatprep.subr.mxu0 0.0
    %363 = vmatpush1.msra.mxu0 0.0
    %364 = vmatprep.subr.mxu0 0.0
    %365 = vmatpush1.msra.mxu0 0.0
    %366 = vmatprep.subr.mxu0 0.0
    %367 = vmatpush1.msra.mxu0 0.0
    %368 = vmatprep.subr.mxu0 0.0
    %369 = vmatpush1.msra.mxu0 0.0
    %370 = vmatprep.subr.mxu0 0.0
    %371 = vmatpush1.msra.mxu0 0.0
    %372 = vmatprep.subr.mxu0 0.0
    %373 = vmatpush1.msra.mxu0 0.0
    %374 = vmatprep.subr.mxu0 0.0
    %375 = vmatpush1.msra.mxu0 0.0
    %376 = vmatprep.subr.mxu0 0.0
    %377 = vmatpush1.msra.mxu0 0.0
    %378 = vmatprep.subr.mxu0 0.0
    %379 = vmatpush1.msra.mxu0 0.0
    %380 = vmatprep.subr.mxu0 0.0
    %381 = vmatpush1.msra.mxu0 0.0
    %382 = vmatprep.subr.mxu0 0.0
    %383 = vmatpush1.msra.mxu0 0.0
    %384 = vmatprep.mubr.f32.mxu0 0.0
    %385 = vmatmul.mubr.f32.gmra.mrb[0].mxu0 %v224
    %v386 = vpop.f32.mrb[0].mxu0
    %v387 = vadd.f32 %v302, %v386
    %v388 = vpop.f32.mrb[0].mxu0
    %389 = vmatprep.mubr.f32.mxu0 0.0
    %390 = vmatmul.mubr.f32.gmra.mrb[0].mxu0 %v227
    %v391 = vpop.f32.mrb[0].mxu0
    %v392 = vadd.f32 %v307, %v391
    %v393 = vpop.f32.mrb[0].mxu0
    %394 = vmatprep.mubr.f32.mxu0 0.0
    %395 = vmatmul.mubr.f32.gmra.mrb[0].mxu0 %v230
    %v396 = vpop.f32.mrb[0].mxu0
    %v397 = vadd.f32 %v312, %v396
    %v398 = vpop.f32.mrb[0].mxu0
    %399 = vmatprep.mubr.f32.mxu0 0.0
    %400 = vmatmul.mubr.f32.gmra.mrb[0].mxu0 %v233
    %v401 = vpop.f32.mrb[0].mxu0
    %v402 = vadd.f32 %v317, %v401
    %v403 = vpop.f32.mrb[0].mxu0
    %404 = vdwg.mxu0
    %v407 = vunpack.c.l.s4 1966171168
    %v408 = vunpack.c.0.s8 %v407
    %v409 = vlaneseq
    %v410 = vshrl.u32 %v409, 7
    %v411 = vsub.s32 %v408, %v410
    %v412 = vrot.slane %v170, %v411
    %v413 = vcombine.high %v412, %v412
    %v415 = vunpack.c.l.s4 1966171168
    %v416 = vunpack.c.0.s8 %v415
    %v417 = vlaneseq
    %v418 = vshrl.u32 %v417, 7
    %v419 = vsub.s32 %v416, %v418
    %v420 = vrot.slane %v412, %v419
    %v422 = vunpack.c.l.s4 1966171168
    %v423 = vunpack.c.0.s8 %v422
    %v424 = vlaneseq
    %v425 = vshrl.u32 %v424, 7
    %v426 = vsub.s32 %v423, %v425
    %v427 = vrot.slane %v413, %v426
    %v428 = vlaneseq
    %v429 = vshrl.u32 %v428, 7
    %v430 = vsub.s32 0, %v429
    %v431 = vrot.slane %v420, %v430
    %v432 = vlaneseq
    %v433 = vshrl.u32 %v432, 7
    %v434 = vsub.s32 0, %v433
    %v435 = vrot.slane %v427, %v434
    %v438 = vadd.f32 %v387, %v431
    %v439 = vadd.f32 %v392, %v431
    %v440 = vadd.f32 %v397, %v435
    %v441 = vadd.f32 %v402, %v435
    %v442 = vtanh.pop %v438
    %v443 = vtanh.pop %v439
    %v444 = vtanh.pop %v440
    %v445 = vtanh.pop %v441
    %v446 = vld [vmem:[%s8] sm:$0x1]
    %v448 = vlaneseq
    %v449 = vshrl.u32 %v448, 7
    %v450 = vsub.s32 0, %v449
    %v451 = vrot.slane %v446, %v450
    %v453 = vmul.f32 %v442, %v451
    %v454 = vmul.f32 %v443, %v451
    %v455 = vmul.f32 %v444, %v451
    %v456 = vmul.f32 %v445, %v451
    %v457 = vsel %vm99, %v453, 0.0
    %458 = vadd.xlane.f32.xlu0 %v457
    %v459 = vpop.xlane.xlu0 %458
    %v460 = vsel %vm99, %v454, 0.0
    %461 = vadd.xlane.f32.xlu0 %v460
    %v462 = vpop.xlane.xlu0 %461
    %v463 = vsel %vm99, %v455, 0.0
    %464 = vadd.xlane.f32.xlu0 %v463
    %v465 = vpop.xlane.xlu0 %464
    %v466 = vsel %vm99, %v456, 0.0
    %467 = vadd.xlane.f32.xlu0 %v466
    %v468 = vpop.xlane.xlu0 %467
    %v473 = vlaneseq
    %v474 = vand.u32 %v473, 127
    %v475 = vlaneseq
    %v476 = vshrl.u32 %v475, 7
    %v477 = vsub.s32 %v474, %v476
    %v478 = vrot.slane %v459, %v477
    %v479 = vadd.s32 %v474, 4294967288
    %v480 = vlaneseq
    %v481 = vshrl.u32 %v480, 7
    %v482 = vsub.s32 %v479, %v481
    %v483 = vrot.slane %v462, %v482
    %vm484 = vcmask 130112
    %v485 = vsel %vm484, %v483, %v478
    %v486 = vlaneseq
    %v487 = vshrl.u32 %v486, 7
    %v488 = vsub.s32 %v474, %v487
    %v489 = vrot.slane %v465, %v488
    %v490 = vlaneseq
    %v491 = vshrl.u32 %v490, 7
    %v492 = vsub.s32 %v479, %v491
    %v493 = vrot.slane %v468, %v492
    %v494 = vsel %vm484, %v493, %v489
    %vm495 = vcmask 1041409
    %v496 = vsel %vm495, %v494, %v485
    %vm498 = vcmask 123904
    %v499 = vsel %vm498, %v496, -inf
    %500 = vmax.xlane.f32.xlu0 %v499
    %v501 = vpop.xlane.xlu0 %500
    %v503 = vlaneseq
    %v504 = vshrl.u32 %v503, 7
    %v505 = vsub.s32 0, %v504
    %v506 = vrot.slane %v501, %v505
    %v507 = vlaneseq
    %v508 = vshrl.u32 %v507, 7
    %v509 = vsub.s32 1, %v508
    %v510 = vrot.slane %v501, %v509
    %v513 = vsub.f32 %v459, %v506
    %v514 = vsub.f32 %v462, %v506
    %v515 = vsub.f32 %v465, %v510
    %v516 = vsub.f32 %v468, %v510
    %v517 = vmul.f32 %v513, 1.442695
    %v518 = vpow.pop %v517
    %v519 = vmul.f32 %v514, 1.442695
    %v520 = vpow.pop %v519
    %v521 = vmul.f32 %v515, 1.442695
    %v522 = vpow.pop %v521
    %v523 = vmul.f32 %v516, 1.442695
    %v524 = vpow.pop %v523
    %529 = vset.pattern.permute.xlu0 0
    %530 = vperm.xlu0 %529, %v518
    %v531 = vpop.permute.xlu0 %530
    %532 = vset.pattern.permute.xlu0 0
    %533 = vperm.xlu0 %532, %v520
    %v534 = vpop.permute.xlu0 %533
    %535 = vset.pattern.permute.xlu0 0
    %536 = vperm.xlu0 %535, %v522
    %v537 = vpop.permute.xlu0 %536
    %538 = vset.pattern.permute.xlu0 0
    %539 = vperm.xlu0 %538, %v524
    %v540 = vpop.permute.xlu0 %539
    %v541 = vlaneseq
    %v542 = vshrl.u32 %v541, 7
    %v543 = vsub.s32 %v474, %v542
    %v544 = vrot.slane %v531, %v543
    %v545 = vlaneseq
    %v546 = vshrl.u32 %v545, 7
    %v547 = vsub.s32 %v479, %v546
    %v548 = vrot.slane %v534, %v547
    %v549 = vsel %vm484, %v548, %v544
    %v550 = vlaneseq
    %v551 = vshrl.u32 %v550, 7
    %v552 = vsub.s32 %v474, %v551
    %v553 = vrot.slane %v537, %v552
    %v554 = vlaneseq
    %v555 = vshrl.u32 %v554, 7
    %v556 = vsub.s32 %v479, %v555
    %v557 = vrot.slane %v540, %v556
    %v558 = vsel %vm484, %v557, %v553
    %v559 = vsel %vm495, %v558, %v549
    %v561 = vsel %vm498, %v559, 0.0
    %562 = vadd.xlane.f32.xlu0 %v561
    %v563 = vpop.xlane.xlu0 %562
    %v565 = vlaneseq
    %v566 = vshrl.u32 %v565, 7
    %v567 = vsub.s32 0, %v566
    %v568 = vrot.slane %v563, %v567
    %v569 = vlaneseq
    %v570 = vshrl.u32 %v569, 7
    %v571 = vsub.s32 1, %v570
    %v572 = vrot.slane %v563, %v571
    %v575 = vrcp.pop %v568
    %v576 = vmul.f32 %v518, %v575
    %v577 = vmul.f32 %v520, %v575
    %v578 = vrcp.pop %v572
    %v579 = vmul.f32 %v522, %v578
    %v580 = vmul.f32 %v524, %v578
    %585 = vset.pattern.permute.xlu0 0
    %586 = vperm.xlu0 %585, %v576
    %v587 = vpop.permute.xlu0 %586
    %588 = vset.pattern.permute.xlu0 0
    %589 = vperm.xlu0 %588, %v577
    %v590 = vpop.permute.xlu0 %589
    %591 = vset.pattern.permute.xlu0 0
    %592 = vperm.xlu0 %591, %v579
    %v593 = vpop.permute.xlu0 %592
    %594 = vset.pattern.permute.xlu0 0
    %595 = vperm.xlu0 %594, %v580
    %v596 = vpop.permute.xlu0 %595
    %v597 = vlaneseq
    %v598 = vshrl.u32 %v597, 7
    %v599 = vsub.s32 %v474, %v598
    %v600 = vrot.slane %v587, %v599
    %v601 = vlaneseq
    %v602 = vshrl.u32 %v601, 7
    %v603 = vsub.s32 %v479, %v602
    %v604 = vrot.slane %v590, %v603
    %v605 = vsel %vm484, %v604, %v600
    %v606 = vlaneseq
    %v607 = vshrl.u32 %v606, 7
    %v608 = vsub.s32 %v474, %v607
    %v609 = vrot.slane %v593, %v608
    %v610 = vlaneseq
    %v611 = vshrl.u32 %v610, 7
    %v612 = vsub.s32 %v479, %v611
    %v613 = vrot.slane %v596, %v612
    %v614 = vsel %vm484, %v613, %v609
    %v615 = vsel %vm495, %v614, %v605
    %617 = vst.msk [vmem:[#allocation8] sm:$0x3] %vm498, %v615
    %v618 = vld [vmem:[%s2] sm:$0xff]
    %v619 = vld [vmem:[%s2 + $0x8] sm:$0xff]
    %v620 = vld [vmem:[%s2 + $0x10] sm:$0xff]
    %v621 = vld [vmem:[%s2 + $0x18] sm:$0xff]
    %v622 = vld [vmem:[%s2 + $0x20] sm:$0xff]
    %v623 = vld [vmem:[%s2 + $0x28] sm:$0xff]
    %vm624 = vcmask 130048
    %v625 = vsel %vm624, %v605, 0
    %627 = vmatprep.subr.mxu0 %v619
    %628 = vmatpush1.msra.mxu0 %v618
    %629 = vmatprep.subr.mxu0 %v622
    %630 = vmatpush1.msra.mxu0 %v621
    %631 = vmatprep.subr.mxu0 0.0
    %632 = vmatpush1.msra.mxu0 0.0
    %633 = vmatprep.subr.mxu0 0.0
    %634 = vmatpush1.msra.mxu0 0.0
    %635 = vmatprep.subr.mxu0 0.0
    %636 = vmatpush1.msra.mxu0 0.0
    %637 = vmatprep.subr.mxu0 0.0
    %638 = vmatpush1.msra.mxu0 0.0
    %639 = vmatprep.subr.mxu0 0.0
    %640 = vmatpush1.msra.mxu0 0.0
    %641 = vmatprep.subr.mxu0 0.0
    %642 = vmatpush1.msra.mxu0 0.0
    %643 = vmatprep.subr.mxu0 0.0
    %644 = vmatpush1.msra.mxu0 0.0
    %645 = vmatprep.subr.mxu0 0.0
    %646 = vmatpush1.msra.mxu0 0.0
    %647 = vmatprep.subr.mxu0 0.0
    %648 = vmatpush1.msra.mxu0 0.0
    %649 = vmatprep.subr.mxu0 0.0
    %650 = vmatpush1.msra.mxu0 0.0
    %651 = vmatprep.subr.mxu0 0.0
    %652 = vmatpush1.msra.mxu0 0.0
    %653 = vmatprep.subr.mxu0 0.0
    %654 = vmatpush1.msra.mxu0 0.0
    %655 = vmatprep.subr.mxu0 0.0
    %656 = vmatpush1.msra.mxu0 0.0
    %657 = vmatprep.subr.mxu0 0.0
    %658 = vmatpush1.msra.mxu0 0.0
    %659 = vmatprep.subr.mxu0 0.0
    %660 = vmatpush1.msra.mxu0 0.0
    %661 = vmatprep.subr.mxu0 0.0
    %662 = vmatpush1.msra.mxu0 0.0
    %663 = vmatprep.subr.mxu0 0.0
    %664 = vmatpush1.msra.mxu0 0.0
    %665 = vmatprep.subr.mxu0 0.0
    %666 = vmatpush1.msra.mxu0 0.0
    %667 = vmatprep.subr.mxu0 0.0
    %668 = vmatpush1.msra.mxu0 0.0
    %669 = vmatprep.subr.mxu0 0.0
    %670 = vmatpush1.msra.mxu0 0.0
    %671 = vmatprep.subr.mxu0 0.0
    %672 = vmatpush1.msra.mxu0 0.0
    %673 = vmatprep.subr.mxu0 0.0
    %674 = vmatpush1.msra.mxu0 0.0
    %675 = vmatprep.subr.mxu0 0.0
    %676 = vmatpush1.msra.mxu0 0.0
    %677 = vmatprep.subr.mxu0 0.0
    %678 = vmatpush1.msra.mxu0 0.0
    %679 = vmatprep.subr.mxu0 0.0
    %680 = vmatpush1.msra.mxu0 0.0
    %681 = vmatprep.subr.mxu0 0.0
    %682 = vmatpush1.msra.mxu0 0.0
    %683 = vmatprep.subr.mxu0 0.0
    %684 = vmatpush1.msra.mxu0 0.0
    %685 = vmatprep.subr.mxu0 0.0
    %686 = vmatpush1.msra.mxu0 0.0
    %687 = vmatprep.subr.mxu0 0.0
    %688 = vmatpush1.msra.mxu0 0.0
    %689 = vmatprep.subr.mxu0 0.0
    %690 = vmatpush1.msra.mxu0 0.0
    %691 = vmatprep.mubr.f32.mxu0 0.0
    %692 = vmatmul.mubr.f32.gmra.mrb[0].mxu0 %v625
    %v693 = vpop.f32.mrb[0].mxu0
    %v694 = vadd.f32 0.0, %v693
    %v695 = vpop.f32.mrb[0].mxu0
    %v696 = vadd.f32 0.0, %v695
    %697 = vdwg.mxu0
    %698 = vmatprep.subr.mxu0 0.0
    %699 = vmatpush1.msra.mxu0 %v620
    %700 = vmatprep.subr.mxu0 0.0
    %701 = vmatpush1.msra.mxu0 %v623
    %702 = vmatprep.subr.mxu0 0.0
    %703 = vmatpush1.msra.mxu0 0.0
    %704 = vmatprep.subr.mxu0 0.0
    %705 = vmatpush1.msra.mxu0 0.0
    %706 = vmatprep.subr.mxu0 0.0
    %707 = vmatpush1.msra.mxu0 0.0
    %708 = vmatprep.subr.mxu0 0.0
    %709 = vmatpush1.msra.mxu0 0.0
    %710 = vmatprep.subr.mxu0 0.0
    %711 = vmatpush1.msra.mxu0 0.0
    %712 = vmatprep.subr.mxu0 0.0
    %713 = vmatpush1.msra.mxu0 0.0
    %714 = vmatprep.subr.mxu0 0.0
    %715 = vmatpush1.msra.mxu0 0.0
    %716 = vmatprep.subr.mxu0 0.0
    %717 = vmatpush1.msra.mxu0 0.0
    %718 = vmatprep.subr.mxu0 0.0
    %719 = vmatpush1.msra.mxu0 0.0
    %720 = vmatprep.subr.mxu0 0.0
    %721 = vmatpush1.msra.mxu0 0.0
    %722 = vmatprep.subr.mxu0 0.0
    %723 = vmatpush1.msra.mxu0 0.0
    %724 = vmatprep.subr.mxu0 0.0
    %725 = vmatpush1.msra.mxu0 0.0
    %726 = vmatprep.subr.mxu0 0.0
    %727 = vmatpush1.msra.mxu0 0.0
    %728 = vmatprep.subr.mxu0 0.0
    %729 = vmatpush1.msra.mxu0 0.0
    %730 = vmatprep.subr.mxu0 0.0
    %731 = vmatpush1.msra.mxu0 0.0
    %732 = vmatprep.subr.mxu0 0.0
    %733 = vmatpush1.msra.mxu0 0.0
    %734 = vmatprep.subr.mxu0 0.0
    %735 = vmatpush1.msra.mxu0 0.0
    %736 = vmatprep.subr.mxu0 0.0
    %737 = vmatpush1.msra.mxu0 0.0
    %738 = vmatprep.subr.mxu0 0.0
    %739 = vmatpush1.msra.mxu0 0.0
    %740 = vmatprep.subr.mxu0 0.0
    %741 = vmatpush1.msra.mxu0 0.0
    %742 = vmatprep.subr.mxu0 0.0
    %743 = vmatpush1.msra.mxu0 0.0
    %744 = vmatprep.subr.mxu0 0.0
    %745 = vmatpush1.msra.mxu0 0.0
    %746 = vmatprep.subr.mxu0 0.0
    %747 = vmatpush1.msra.mxu0 0.0
    %748 = vmatprep.subr.mxu0 0.0
    %749 = vmatpush1.msra.mxu0 0.0
    %750 = vmatprep.subr.mxu0 0.0
    %751 = vmatpush1.msra.mxu0 0.0
    %752 = vmatprep.subr.mxu0 0.0
    %753 = vmatpush1.msra.mxu0 0.0
    %754 = vmatprep.subr.mxu0 0.0
    %755 = vmatpush1.msra.mxu0 0.0
    %756 = vmatprep.subr.mxu0 0.0
    %757 = vmatpush1.msra.mxu0 0.0
    %758 = vmatprep.subr.mxu0 0.0
    %759 = vmatpush1.msra.mxu0 0.0
    %760 = vmatprep.subr.mxu0 0.0
    %761 = vmatpush1.msra.mxu0 0.0
    %762 = vmatprep.mubr.f32.mxu0 0.0
    %763 = vmatmul.mubr.f32.gmra.mrb[0].mxu0 %v625
    %v764 = vpop.f32.mrb[0].mxu0
    %v765 = vadd.f32 0.0, %v764
    %v766 = vpop.f32.mrb[0].mxu0
    %767 = vdwg.mxu0
    %v768 = vld [vmem:[%s2 + $0x30] sm:$0xff]
    %v769 = vld [vmem:[%s2 + $0x38] sm:$0xff]
    %v770 = vld [vmem:[%s2 + $0x40] sm:$0xff]
    %v771 = vld [vmem:[%s2 + $0x48] sm:$0xff]
    %v772 = vld [vmem:[%s2 + $0x50] sm:$0xff]
    %v773 = vld [vmem:[%s2 + $0x58] sm:$0xff]
    %v774 = vsel %vm624, %v614, 0
    %776 = vmatprep.subr.mxu0 %v769
    %777 = vmatpush1.msra.mxu0 %v768
    %778 = vmatprep.subr.mxu0 %v772
    %779 = vmatpush1.msra.mxu0 %v771
    %780 = vmatprep.subr.mxu0 0.0
    %781 = vmatpush1.msra.mxu0 0.0
    %782 = vmatprep.subr.mxu0 0.0
    %783 = vmatpush1.msra.mxu0 0.0
    %784 = vmatprep.subr.mxu0 0.0
    %785 = vmatpush1.msra.mxu0 0.0
    %786 = vmatprep.subr.mxu0 0.0
    %787 = vmatpush1.msra.mxu0 0.0
    %788 = vmatprep.subr.mxu0 0.0
    %789 = vmatpush1.msra.mxu0 0.0
    %790 = vmatprep.subr.mxu0 0.0
    %791 = vmatpush1.msra.mxu0 0.0
    %792 = vmatprep.subr.mxu0 0.0
    %793 = vmatpush1.msra.mxu0 0.0
    %794 = vmatprep.subr.mxu0 0.0
    %795 = vmatpush1.msra.mxu0 0.0
    %796 = vmatprep.subr.mxu0 0.0
    %797 = vmatpush1.msra.mxu0 0.0
    %798 = vmatprep.subr.mxu0 0.0
    %799 = vmatpush1.msra.mxu0 0.0
    %800 = vmatprep.subr.mxu0 0.0
    %801 = vmatpush1.msra.mxu0 0.0
    %802 = vmatprep.subr.mxu0 0.0
    %803 = vmatpush1.msra.mxu0 0.0
    %804 = vmatprep.subr.mxu0 0.0
    %805 = vmatpush1.msra.mxu0 0.0
    %806 = vmatprep.subr.mxu0 0.0
    %807 = vmatpush1.msra.mxu0 0.0
    %808 = vmatprep.subr.mxu0 0.0
    %809 = vmatpush1.msra.mxu0 0.0
    %810 = vmatprep.subr.mxu0 0.0
    %811 = vmatpush1.msra.mxu0 0.0
    %812 = vmatprep.subr.mxu0 0.0
    %813 = vmatpush1.msra.mxu0 0.0
    %814 = vmatprep.subr.mxu0 0.0
    %815 = vmatpush1.msra.mxu0 0.0
    %816 = vmatprep.subr.mxu0 0.0
    %817 = vmatpush1.msra.mxu0 0.0
    %818 = vmatprep.subr.mxu0 0.0
    %819 = vmatpush1.msra.mxu0 0.0
    %820 = vmatprep.subr.mxu0 0.0
    %821 = vmatpush1.msra.mxu0 0.0
    %822 = vmatprep.subr.mxu0 0.0
    %823 = vmatpush1.msra.mxu0 0.0
    %824 = vmatprep.subr.mxu0 0.0
    %825 = vmatpush1.msra.mxu0 0.0
    %826 = vmatprep.subr.mxu0 0.0
    %827 = vmatpush1.msra.mxu0 0.0
    %828 = vmatprep.subr.mxu0 0.0
    %829 = vmatpush1.msra.mxu0 0.0
    %830 = vmatprep.subr.mxu0 0.0
    %831 = vmatpush1.msra.mxu0 0.0
    %832 = vmatprep.subr.mxu0 0.0
    %833 = vmatpush1.msra.mxu0 0.0
    %834 = vmatprep.subr.mxu0 0.0
    %835 = vmatpush1.msra.mxu0 0.0
    %836 = vmatprep.subr.mxu0 0.0
    %837 = vmatpush1.msra.mxu0 0.0
    %838 = vmatprep.subr.mxu0 0.0
    %839 = vmatpush1.msra.mxu0 0.0
    %840 = vmatprep.mubr.f32.mxu0 0.0
    %841 = vmatmul.mubr.f32.gmra.mrb[0].mxu0 %v774
    %v842 = vpop.f32.mrb[0].mxu0
    %v843 = vadd.f32 0.0, %v842
    %v844 = vpop.f32.mrb[0].mxu0
    %v845 = vadd.f32 0.0, %v844
    %846 = vdwg.mxu0
    %847 = vmatprep.subr.mxu0 0.0
    %848 = vmatpush1.msra.mxu0 %v770
    %849 = vmatprep.subr.mxu0 0.0
    %850 = vmatpush1.msra.mxu0 %v773
    %851 = vmatprep.subr.mxu0 0.0
    %852 = vmatpush1.msra.mxu0 0.0
    %853 = vmatprep.subr.mxu0 0.0
    %854 = vmatpush1.msra.mxu0 0.0
    %855 = vmatprep.subr.mxu0 0.0
    %856 = vmatpush1.msra.mxu0 0.0
    %857 = vmatprep.subr.mxu0 0.0
    %858 = vmatpush1.msra.mxu0 0.0
    %859 = vmatprep.subr.mxu0 0.0
    %860 = vmatpush1.msra.mxu0 0.0
    %861 = vmatprep.subr.mxu0 0.0
    %862 = vmatpush1.msra.mxu0 0.0
    %863 = vmatprep.subr.mxu0 0.0
    %864 = vmatpush1.msra.mxu0 0.0
    %865 = vmatprep.subr.mxu0 0.0
    %866 = vmatpush1.msra.mxu0 0.0
    %867 = vmatprep.subr.mxu0 0.0
    %868 = vmatpush1.msra.mxu0 0.0
    %869 = vmatprep.subr.mxu0 0.0
    %870 = vmatpush1.msra.mxu0 0.0
    %871 = vmatprep.subr.mxu0 0.0
    %872 = vmatpush1.msra.mxu0 0.0
    %873 = vmatprep.subr.mxu0 0.0
    %874 = vmatpush1.msra.mxu0 0.0
    %875 = vmatprep.subr.mxu0 0.0
    %876 = vmatpush1.msra.mxu0 0.0
    %877 = vmatprep.subr.mxu0 0.0
    %878 = vmatpush1.msra.mxu0 0.0
    %879 = vmatprep.subr.mxu0 0.0
    %880 = vmatpush1.msra.mxu0 0.0
    %881 = vmatprep.subr.mxu0 0.0
    %882 = vmatpush1.msra.mxu0 0.0
    %883 = vmatprep.subr.mxu0 0.0
    %884 = vmatpush1.msra.mxu0 0.0
    %885 = vmatprep.subr.mxu0 0.0
    %886 = vmatpush1.msra.mxu0 0.0
    %887 = vmatprep.subr.mxu0 0.0
    %888 = vmatpush1.msra.mxu0 0.0
    %889 = vmatprep.subr.mxu0 0.0
    %890 = vmatpush1.msra.mxu0 0.0
    %891 = vmatprep.subr.mxu0 0.0
    %892 = vmatpush1.msra.mxu0 0.0
    %893 = vmatprep.subr.mxu0 0.0
    %894 = vmatpush1.msra.mxu0 0.0
    %895 = vmatprep.subr.mxu0 0.0
    %896 = vmatpush1.msra.mxu0 0.0
    %897 = vmatprep.subr.mxu0 0.0
    %898 = vmatpush1.msra.mxu0 0.0
    %899 = vmatprep.subr.mxu0 0.0
    %900 = vmatpush1.msra.mxu0 0.0
    %901 = vmatprep.subr.mxu0 0.0
    %902 = vmatpush1.msra.mxu0 0.0
    %903 = vmatprep.subr.mxu0 0.0
    %904 = vmatpush1.msra.mxu0 0.0
    %905 = vmatprep.subr.mxu0 0.0
    %906 = vmatpush1.msra.mxu0 0.0
    %907 = vmatprep.subr.mxu0 0.0
    %908 = vmatpush1.msra.mxu0 0.0
    %909 = vmatprep.subr.mxu0 0.0
    %910 = vmatpush1.msra.mxu0 0.0
    %911 = vmatprep.mubr.f32.mxu0 0.0
    %912 = vmatmul.mubr.f32.gmra.mrb[0].mxu0 %v774
    %v913 = vpop.f32.mrb[0].mxu0
    %v914 = vadd.f32 0.0, %v913
    %v915 = vpop.f32.mrb[0].mxu0
    %916 = vdwg.mxu0
    %v920 = vrot.slane %v843, 7
    %v921 = vrot.slane %v845, 7
    %v922 = vrot.slane %v914, 7
    %v926 = vsel %vm78, %v694, %v920
    %v927 = vsel %vm78, %v696, %v921
    %v928 = vsel %vm78, %v765, %v922
    %932 = vrot.lane.b32.xlu0 %v926, 32
    %v933 = vpop.permute.xlu0 %932
    %934 = vrot.lane.b32.xlu0 %v927, 32
    %v935 = vpop.permute.xlu0 %934
    %936 = vrot.lane.b32.xlu0 %v928, 32
    %v937 = vpop.permute.xlu0 %936
    %v938 = vsel %vm99, %v933, %v935
    %v939 = vsel %vm99, %v935, %v937
    %v942 = vsel %vm99, %v87, %v933
    %v943 = vld [vmem:[%s9] sm:$0xff]
    %v944 = vld [vmem:[%s9 + $0x8] sm:$0xff]
    %v945 = vld [vmem:[%s9 + $0x10] sm:$0xff]
    %v946 = vld [vmem:[%s9 + $0x18] sm:$0xff]
    %v947 = vld [vmem:[%s9 + $0x20] sm:$0xff]
    %v948 = vld [vmem:[%s9 + $0x28] sm:$0xff]
    %v949 = vld [vmem:[%s9 + $0x30] sm:$0xff]
    %v950 = vld [vmem:[%s9 + $0x38] sm:$0xff]
    %v951 = vld [vmem:[%s9 + $0x40] sm:$0xff]
    %v952 = vld [vmem:[%s9 + $0x48] sm:$0xff]
    %v953 = vld [vmem:[%s9 + $0x50] sm:$0xff]
    %v954 = vld [vmem:[%s9 + $0x58] sm:$0xff]
    %v955 = vld [vmem:[%s9 + $0x60] sm:$0xff]
    %v956 = vld [vmem:[%s9 + $0x68] sm:$0xff]
    %v957 = vld [vmem:[%s9 + $0x70] sm:$0xff]
    %v958 = vld [vmem:[%s9 + $0x78] sm:$0xff]
    %v959 = vld [vmem:[%s9 + $0x80] sm:$0xff]
    %v960 = vld [vmem:[%s9 + $0x88] sm:$0xff]
    %v961 = vld [vmem:[%s9 + $0x90] sm:$0xff]
    %v962 = vld [vmem:[%s9 + $0x98] sm:$0xff]
    %v963 = vld [vmem:[%s9 + $0xa0] sm:$0xff]
    %v964 = vld [vmem:[%s9 + $0xa8] sm:$0xff]
    %v965 = vld [vmem:[%s9 + $0xb0] sm:$0xff]
    %v966 = vld [vmem:[%s9 + $0xb8] sm:$0xff]
    %v967 = vld [vmem:[%s9 + $0xc0] sm:$0xff]
    %v968 = vld [vmem:[%s9 + $0xc8] sm:$0xff]
    %v969 = vld [vmem:[%s9 + $0xd0] sm:$0xff]
    %v970 = vld [vmem:[%s9 + $0xd8] sm:$0xff]
    %v971 = vld [vmem:[%s9 + $0xe0] sm:$0xff]
    %v972 = vld [vmem:[%s9 + $0xe8] sm:$0xff]
    %v973 = vld [vmem:[%s9 + $0xf0] sm:$0xff]
    %v974 = vld [vmem:[%s9 + $0xf8] sm:$0xff]
    %v975 = vld [vmem:[%s9 + $0x100] sm:$0xff]
    %v976 = vld [vmem:[%s9 + $0x108] sm:$0xff]
    %v977 = vld [vmem:[%s9 + $0x110] sm:$0xff]
    %v978 = vld [vmem:[%s9 + $0x118] sm:$0xff]
    %v979 = vld [vmem:[%s9 + $0x120] sm:$0xff]
    %v980 = vld [vmem:[%s9 + $0x128] sm:$0xff]
    %v981 = vld [vmem:[%s9 + $0x130] sm:$0xff]
    %v982 = vld [vmem:[%s9 + $0x138] sm:$0xff]
    %v983 = vld [vmem:[%s9 + $0x140] sm:$0xff]
    %v984 = vld [vmem:[%s10] sm:$0x1]
    %v986 = vlaneseq
    %v987 = vshrl.u32 %v986, 7
    %v988 = vsub.s32 0, %v987
    %v989 = vrot.slane %v984, %v988
    %vm991 = vcmask 588800
    %v992 = vsel %vm991, %v939, 0
    %994 = vmatprep.subr.mxu0 0.0
    %995 = vmatpush1.msra.mxu0 %v943
    %996 = vmatprep.subr.mxu0 0.0
    %997 = vmatpush1.msra.mxu0 %v944
    %998 = vmatprep.subr.mxu0 0.0
    %999 = vmatpush1.msra.mxu0 %v945
    %1000 = vmatprep.subr.mxu0 0.0
    %1001 = vmatpush1.msra.mxu0 %v946
    %1002 = vmatprep.subr.mxu0 0.0
    %1003 = vmatpush1.msra.mxu0 %v947
    %1004 = vmatprep.subr.mxu0 0.0
    %1005 = vmatpush1.msra.mxu0 %v948
    %1006 = vmatprep.subr.mxu0 0.0
    %1007 = vmatpush1.msra.mxu0 %v949
    %1008 = vmatprep.subr.mxu0 0.0
    %1009 = vmatpush1.msra.mxu0 %v950
    %1010 = vmatprep.subr.mxu0 0.0
    %1011 = vmatpush1.msra.mxu0 %v951
    %1012 = vmatprep.subr.mxu0 0.0
    %1013 = vmatpush1.msra.mxu0 %v952
    %1014 = vmatprep.subr.mxu0 0.0
    %1015 = vmatpush1.msra.mxu0 %v953
    %1016 = vmatprep.subr.mxu0 0.0
    %1017 = vmatpush1.msra.mxu0 %v954
    %1018 = vmatprep.subr.mxu0 0.0
    %1019 = vmatpush1.msra.mxu0 %v955
    %1020 = vmatprep.subr.mxu0 0.0
    %1021 = vmatpush1.msra.mxu0 %v956
    %1022 = vmatprep.subr.mxu0 0.0
    %1023 = vmatpush1.msra.mxu0 %v957
    %1024 = vmatprep.subr.mxu0 0.0
    %1025 = vmatpush1.msra.mxu0 %v958
    %1026 = vmatprep.subr.mxu0 0.0
    %1027 = vmatpush1.msra.mxu0 %v959
    %1028 = vmatprep.subr.mxu0 0.0
    %1029 = vmatpush1.msra.mxu0 %v960
    %1030 = vmatprep.subr.mxu0 0.0
    %1031 = vmatpush1.msra.mxu0 %v961
    %1032 = vmatprep.subr.mxu0 0.0
    %1033 = vmatpush1.msra.mxu0 %v962
    %1034 = vmatprep.subr.mxu0 0.0
    %1035 = vmatpush1.msra.mxu0 %v963
    %1036 = vmatprep.subr.mxu0 0.0
    %1037 = vmatpush1.msra.mxu0 %v964
    %1038 = vmatprep.subr.mxu0 0.0
    %1039 = vmatpush1.msra.mxu0 %v965
    %1040 = vmatprep.subr.mxu0 0.0
    %1041 = vmatpush1.msra.mxu0 %v966
    %1042 = vmatprep.subr.mxu0 0.0
    %1043 = vmatpush1.msra.mxu0 %v967
    %1044 = vmatprep.subr.mxu0 0.0
    %1045 = vmatpush1.msra.mxu0 %v968
    %1046 = vmatprep.subr.mxu0 0.0
    %1047 = vmatpush1.msra.mxu0 %v969
    %1048 = vmatprep.subr.mxu0 0.0
    %1049 = vmatpush1.msra.mxu0 %v970
    %1050 = vmatprep.subr.mxu0 0.0
    %1051 = vmatpush1.msra.mxu0 %v971
    %1052 = vmatprep.subr.mxu0 0.0
    %1053 = vmatpush1.msra.mxu0 %v972
    %1054 = vmatprep.subr.mxu0 0.0
    %1055 = vmatpush1.msra.mxu0 %v973
    %1056 = vmatprep.subr.mxu0 0.0
    %1057 = vmatpush1.msra.mxu0 %v974
    %1058 = vmatprep.mubr.f32.mxu0 %v938
    %1059 = vmatmul.mubr.f32.gmra.mrb[0].mxu0 %v942
    %v1060 = vpop.f32.mrb[0].mxu0
    %v1061 = vadd.f32 %v989, %v1060
    %v1062 = vpop.f32.mrb[0].mxu0
    %1063 = vdwg.mxu0
    %1064 = vmatprep.subr.mxu0 0.0
    %1065 = vmatpush1.msra.mxu0 %v975
    %1066 = vmatprep.subr.mxu0 0.0
    %1067 = vmatpush1.msra.mxu0 %v976
    %1068 = vmatprep.subr.mxu0 0.0
    %1069 = vmatpush1.msra.mxu0 %v977
    %1070 = vmatprep.subr.mxu0 0.0
    %1071 = vmatpush1.msra.mxu0 %v978
    %1072 = vmatprep.subr.mxu0 0.0
    %1073 = vmatpush1.msra.mxu0 %v979
    %1074 = vmatprep.subr.mxu0 0.0
    %1075 = vmatpush1.msra.mxu0 %v980
    %1076 = vmatprep.subr.mxu0 0.0
    %1077 = vmatpush1.msra.mxu0 %v981
    %1078 = vmatprep.subr.mxu0 0.0
    %1079 = vmatpush1.msra.mxu0 %v982
    %1080 = vmatprep.subr.mxu0 0.0
    %1081 = vmatpush1.msra.mxu0 %v983
    %1082 = vmatprep.subr.mxu0 0.0
    %1083 = vmatpush1.msra.mxu0 0.0
    %1084 = vmatprep.subr.mxu0 0.0
    %1085 = vmatpush1.msra.mxu0 0.0
    %1086 = vmatprep.subr.mxu0 0.0
    %1087 = vmatpush1.msra.mxu0 0.0
    %1088 = vmatprep.subr.mxu0 0.0
    %1089 = vmatpush1.msra.mxu0 0.0
    %1090 = vmatprep.subr.mxu0 0.0
    %1091 = vmatpush1.msra.mxu0 0.0
    %1092 = vmatprep.subr.mxu0 0.0
    %1093 = vmatpush1.msra.mxu0 0.0
    %1094 = vmatprep.subr.mxu0 0.0
    %1095 = vmatpush1.msra.mxu0 0.0
    %1096 = vmatprep.subr.mxu0 0.0
    %1097 = vmatpush1.msra.mxu0 0.0
    %1098 = vmatprep.subr.mxu0 0.0
    %1099 = vmatpush1.msra.mxu0 0.0
    %1100 = vmatprep.subr.mxu0 0.0
    %1101 = vmatpush1.msra.mxu0 0.0
    %1102 = vmatprep.subr.mxu0 0.0
    %1103 = vmatpush1.msra.mxu0 0.0
    %1104 = vmatprep.subr.mxu0 0.0
    %1105 = vmatpush1.msra.mxu0 0.0
    %1106 = vmatprep.subr.mxu0 0.0
    %1107 = vmatpush1.msra.mxu0 0.0
    %1108 = vmatprep.subr.mxu0 0.0
    %1109 = vmatpush1.msra.mxu0 0.0
    %1110 = vmatprep.subr.mxu0 0.0
    %1111 = vmatpush1.msra.mxu0 0.0
    %1112 = vmatprep.subr.mxu0 0.0
    %1113 = vmatpush1.msra.mxu0 0.0
    %1114 = vmatprep.subr.mxu0 0.0
    %1115 = vmatpush1.msra.mxu0 0.0
    %1116 = vmatprep.subr.mxu0 0.0
    %1117 = vmatpush1.msra.mxu0 0.0
    %1118 = vmatprep.subr.mxu0 0.0
    %1119 = vmatpush1.msra.mxu0 0.0
    %1120 = vmatprep.subr.mxu0 0.0
    %1121 = vmatpush1.msra.mxu0 0.0
    %1122 = vmatprep.subr.mxu0 0.0
    %1123 = vmatpush1.msra.mxu0 0.0
    %1124 = vmatprep.subr.mxu0 0.0
    %1125 = vmatpush1.msra.mxu0 0.0
    %1126 = vmatprep.subr.mxu0 0.0
    %1127 = vmatpush1.msra.mxu0 0.0
    %1128 = vmatprep.mubr.f32.mxu0 0.0
    %1129 = vmatmul.mubr.f32.gmra.mrb[0].mxu0 %v992
    %v1130 = vpop.f32.mrb[0].mxu0
    %v1131 = vadd.f32 %v1061, %v1130
    %v1132 = vpop.f32.mrb[0].mxu0
    %1133 = vdwg.mxu0
    %v1134 = vld [vmem:[%s11] sm:$0xff]
    %v1135 = vld [vmem:[%s11 + $0x8] sm:$0xff]
    %v1136 = vld [vmem:[%s11 + $0x10] sm:$0xff]
    %v1137 = vld [vmem:[%s11 + $0x18] sm:$0xff]
    %v1138 = vld [vmem:[%s12] sm:$0x1]
    %v1140 = vlaneseq
    %v1141 = vshrl.u32 %v1140, 7
    %v1142 = vsub.s32 0, %v1141
    %v1143 = vrot.slane %v1138, %v1142
    %1145 = vmatprep.subr.mxu0 0.0
    %1146 = vmatpush1.msra.mxu0 %v1134
    %1147 = vmatprep.subr.mxu0 0.0
    %1148 = vmatpush1.msra.mxu0 %v1135
    %1149 = vmatprep.subr.mxu0 0.0
    %1150 = vmatpush1.msra.mxu0 %v1136
    %1151 = vmatprep.subr.mxu0 0.0
    %1152 = vmatpush1.msra.mxu0 %v1137
    %1153 = vmatprep.subr.mxu0 0.0
    %1154 = vmatpush1.msra.mxu0 0.0
    %1155 = vmatprep.subr.mxu0 0.0
    %1156 = vmatpush1.msra.mxu0 0.0
    %1157 = vmatprep.subr.mxu0 0.0
    %1158 = vmatpush1.msra.mxu0 0.0
    %1159 = vmatprep.subr.mxu0 0.0
    %1160 = vmatpush1.msra.mxu0 0.0
    %1161 = vmatprep.subr.mxu0 0.0
    %1162 = vmatpush1.msra.mxu0 0.0
    %1163 = vmatprep.subr.mxu0 0.0
    %1164 = vmatpush1.msra.mxu0 0.0
    %1165 = vmatprep.subr.mxu0 0.0
    %1166 = vmatpush1.msra.mxu0 0.0
    %1167 = vmatprep.subr.mxu0 0.0
    %1168 = vmatpush1.msra.mxu0 0.0
    %1169 = vmatprep.subr.mxu0 0.0
    %1170 = vmatpush1.msra.mxu0 0.0
    %1171 = vmatprep.subr.mxu0 0.0
    %1172 = vmatpush1.msra.mxu0 0.0
    %1173 = vmatprep.subr.mxu0 0.0
    %1174 = vmatpush1.msra.mxu0 0.0
    %1175 = vmatprep.subr.mxu0 0.0
    %1176 = vmatpush1.msra.mxu0 0.0
    %1177 = vmatprep.subr.mxu0 0.0
    %1178 = vmatpush1.msra.mxu0 0.0
    %1179 = vmatprep.subr.mxu0 0.0
    %1180 = vmatpush1.msra.mxu0 0.0
    %1181 = vmatprep.subr.mxu0 0.0
    %1182 = vmatpush1.msra.mxu0 0.0
    %1183 = vmatprep.subr.mxu0 0.0
    %1184 = vmatpush1.msra.mxu0 0.0
    %1185 = vmatprep.subr.mxu0 0.0
    %1186 = vmatpush1.msra.mxu0 0.0
    %1187 = vmatprep.subr.mxu0 0.0
    %1188 = vmatpush1.msra.mxu0 0.0
    %1189 = vmatprep.subr.mxu0 0.0
    %1190 = vmatpush1.msra.mxu0 0.0
    %1191 = vmatprep.subr.mxu0 0.0
    %1192 = vmatpush1.msra.mxu0 0.0
    %1193 = vmatprep.subr.mxu0 0.0
    %1194 = vmatpush1.msra.mxu0 0.0
    %1195 = vmatprep.subr.mxu0 0.0
    %1196 = vmatpush1.msra.mxu0 0.0
    %1197 = vmatprep.subr.mxu0 0.0
    %1198 = vmatpush1.msra.mxu0 0.0
    %1199 = vmatprep.subr.mxu0 0.0
    %1200 = vmatpush1.msra.mxu0 0.0
    %1201 = vmatprep.subr.mxu0 0.0
    %1202 = vmatpush1.msra.mxu0 0.0
    %1203 = vmatprep.subr.mxu0 0.0
    %1204 = vmatpush1.msra.mxu0 0.0
    %1205 = vmatprep.subr.mxu0 0.0
    %1206 = vmatpush1.msra.mxu0 0.0
    %1207 = vmatprep.subr.mxu0 0.0
    %1208 = vmatpush1.msra.mxu0 0.0
    %1209 = vmatprep.mubr.f32.mxu0 0.0
    %1210 = vmatmul.mubr.f32.gmra.mrb[0].mxu0 %v101
    %v1211 = vpop.f32.mrb[0].mxu0
    %v1212 = vadd.f32 %v1143, %v1211
    %v1213 = vpop.f32.mrb[0].mxu0
    %1214 = vdwg.mxu0
    %v1215 = vadd.f32 %v1131, %v1212
    %v1216 = vxor.u32 %v1215, 2147483648
    %v1217 = vmul.f32 %v1216, 1.442695
    %v1218 = vpow.pop %v1217
    %v1219 = vadd.f32 %v1218, 1.0
    %v1220 = vrcp.pop %v1219
    %v1221 = vmul.f32 1.0, %v1220
    %1223 = vrot.lane.b32.xlu0 %v1212, 64
    %v1224 = vpop.permute.xlu0 %1223
    %v1226 = vmul.f32 %v1221, %v1224
    %1228 = vrot.lane.b32.xlu0 %v1226, 64
    %v1229 = vpop.permute.xlu0 %1228
    %v1231 = vadd.f32 %v1131, %v1229
    %v1232 = vtanh.pop %v1231
    %v1233 = vsub.f32 1.0, %v1221
    %1235 = vrot.lane.b32.xlu0 %v1232, 96
    %v1236 = vpop.permute.xlu0 %1235
    %v1238 = vmul.f32 %v1233, %v1236
    %1239 = vrot.lane.b32.xlu0 %v68, 32
    %v1240 = vpop.permute.xlu0 %1239
    %v1242 = vmul.f32 %v1221, %v1240
    %v1243 = vadd.f32 %v1238, %v1242
    %1245 = vrot.lane.b32.xlu0 %v1243, 96
    %v1246 = vpop.permute.xlu0 %1245
    %vm1248 = vcmask 254976
    %1249 = vst.msk [vmem:[#allocation6] sm:$0x3] %vm1248, %v1246
    %v1250 = vld [vmem:[%s13] sm:$0xff]
    %v1251 = vld [vmem:[%s13 + $0x8] sm:$0xff]
    %v1252 = vld [vmem:[%s13 + $0x10] sm:$0xff]
    %v1253 = vld [vmem:[%s13 + $0x18] sm:$0xff]
    %v1254 = vld [vmem:[%s14] sm:$0x1]
    %v1256 = vlaneseq
    %v1257 = vshrl.u32 %v1256, 7
    %v1258 = vsub.s32 0, %v1257
    %v1259 = vrot.slane %v1254, %v1258
    %v1261 = vsel %vm99, %v1246, 0
    %1263 = vmatprep.subr.mxu0 0.0
    %1264 = vmatpush1.msra.mxu0 %v1250
    %1265 = vmatprep.subr.mxu0 0.0
    %1266 = vmatpush1.msra.mxu0 %v1251
    %1267 = vmatprep.subr.mxu0 0.0
    %1268 = vmatpush1.msra.mxu0 %v1252
    %1269 = vmatprep.subr.mxu0 0.0
    %1270 = vmatpush1.msra.mxu0 %v1253
    %1271 = vmatprep.subr.mxu0 0.0
    %1272 = vmatpush1.msra.mxu0 0.0
    %1273 = vmatprep.subr.mxu0 0.0
    %1274 = vmatpush1.msra.mxu0 0.0
    %1275 = vmatprep.subr.mxu0 0.0
    %1276 = vmatpush1.msra.mxu0 0.0
    %1277 = vmatprep.subr.mxu0 0.0
    %1278 = vmatpush1.msra.mxu0 0.0
    %1279 = vmatprep.subr.mxu0 0.0
    %1280 = vmatpush1.msra.mxu0 0.0
    %1281 = vmatprep.subr.mxu0 0.0
    %1282 = vmatpush1.msra.mxu0 0.0
    %1283 = vmatprep.subr.mxu0 0.0
    %1284 = vmatpush1.msra.mxu0 0.0
    %1285 = vmatprep.subr.mxu0 0.0
    %1286 = vmatpush1.msra.mxu0 0.0
    %1287 = vmatprep.subr.mxu0 0.0
    %1288 = vmatpush1.msra.mxu0 0.0
    %1289 = vmatprep.subr.mxu0 0.0
    %1290 = vmatpush1.msra.mxu0 0.0
    %1291 = vmatprep.subr.mxu0 0.0
    %1292 = vmatpush1.msra.mxu0 0.0
    %1293 = vmatprep.subr.mxu0 0.0
    %1294 = vmatpush1.msra.mxu0 0.0
    %1295 = vmatprep.subr.mxu0 0.0
    %1296 = vmatpush1.msra.mxu0 0.0
    %1297 = vmatprep.subr.mxu0 0.0
    %1298 = vmatpush1.msra.mxu0 0.0
    %1299 = vmatprep.subr.mxu0 0.0
    %1300 = vmatpush1.msra.mxu0 0.0
    %1301 = vmatprep.subr.mxu0 0.0
    %1302 = vmatpush1.msra.mxu0 0.0
    %1303 = vmatprep.subr.mxu0 0.0
    %1304 = vmatpush1.msra.mxu0 0.0
    %1305 = vmatprep.subr.mxu0 0.0
    %1306 = vmatpush1.msra.mxu0 0.0
    %1307 = vmatprep.subr.mxu0 0.0
    %1308 = vmatpush1.msra.mxu0 0.0
    %1309 = vmatprep.subr.mxu0 0.0
    %1310 = vmatpush1.msra.mxu0 0.0
    %1311 = vmatprep.subr.mxu0 0.0
    %1312 = vmatpush1.msra.mxu0 0.0
    %1313 = vmatprep.subr.mxu0 0.0
    %1314 = vmatpush1.msra.mxu0 0.0
    %1315 = vmatprep.subr.mxu0 0.0
    %1316 = vmatpush1.msra.mxu0 0.0
    %1317 = vmatprep.subr.mxu0 0.0
    %1318 = vmatpush1.msra.mxu0 0.0
    %1319 = vmatprep.subr.mxu0 0.0
    %1320 = vmatpush1.msra.mxu0 0.0
    %1321 = vmatprep.subr.mxu0 0.0
    %1322 = vmatpush1.msra.mxu0 0.0
    %1323 = vmatprep.subr.mxu0 0.0
    %1324 = vmatpush1.msra.mxu0 0.0
    %1325 = vmatprep.subr.mxu0 0.0
    %1326 = vmatpush1.msra.mxu0 0.0
    %1327 = vmatprep.mubr.f32.mxu0 0.0
    %1328 = vmatmul.mubr.f32.gmra.mrb[0].mxu0 %v1261
    %v1329 = vpop.f32.mrb[0].mxu0
    %v1330 = vadd.f32 %v1259, %v1329
    %v1331 = vpop.f32.mrb[0].mxu0
    %1332 = vdwg.mxu0
    %v1333 = vsel %vm1248, %v1330, -inf
    %1334 = vmax.xlane.f32.xlu0 %v1333
    %v1335 = vpop.xlane.xlu0 %1334
    %v1336 = vsub.f32 %v1330, %v1335
    %v1337 = vmul.f32 %v1336, 1.442695
    %v1338 = vpow.pop %v1337
    %v1339 = vsel %vm1248, %v1338, 0.0
    %1340 = vadd.xlane.f32.xlu0 %v1339
    %v1341 = vpop.xlane.xlu0 %1340
    %v1342 = vrcp.pop %v1341
    %v1343 = vmul.f32 %v1338, %v1342
    %1344 = vst.msk [vmem:[#allocation5] sm:$0x3] %vm1248, %v1343
    // Predicated region
    $region66: #{tpu_custom_call.1} parent=1 // pred_check
      _
    $region67: #{tpu_custom_call.1} parent=1 // pred_check_branch
      %1346 = sbr.rel (0) target = $region69
    $region68: #{tpu_custom_call.1} parent=1 // pred_region
      %s1348 = ssub.s32 32, 32
      %1349 = vsyncadd [#allocation3], %s1348
      %s1351 = sshll.u32 [#allocation5], 4
      %s1352 = int_to_ptr.vmem [resolvable:$true] %s1351
      %1354 = dma.vmem_to_hbm [thread:$0]  %s1352, 32, %s15, [#allocation3]
    $region69: #{tpu_custom_call.1} parent=1 // pred_fallthru
      _
    // Predicated region
    $region70: #{tpu_custom_call.1} parent=1 // pred_check
      _
    $region71: #{tpu_custom_call.1} parent=1 // pred_check_branch
      %1356 = sbr.rel (0) target = $region73
    $region72: #{tpu_custom_call.1} parent=1 // pred_region
      %s1358 = ssub.s32 32, 32
      %1359 = vsyncadd [#allocation7], %s1358
      %s1361 = sshll.u32 [#allocation6], 4
      %s1362 = int_to_ptr.vmem [resolvable:$true] %s1361
      %1364 = dma.vmem_to_hbm [thread:$0]  %s1362, 32, %s16, [#allocation7]
    $region73: #{tpu_custom_call.1} parent=1 // pred_fallthru
      _
    // Predicated region
    $region74: #{tpu_custom_call.1} parent=1 // pred_check
      _
    $region75: #{tpu_custom_call.1} parent=1 // pred_check_branch
      %1366 = sbr.rel (0) target = $region77
    $region76: #{tpu_custom_call.1} parent=1 // pred_region
      %s1368 = ssub.s32 32, 32
      %1369 = vsyncadd [#allocation7], %s1368
      %s1371 = sshll.u32 [#allocation8], 4
      %s1372 = int_to_ptr.vmem [resolvable:$true] %s1371
      %1374 = dma.vmem_to_hbm [thread:$0]  %s1372, 32, %s17, [#allocation7]
    $region77: #{tpu_custom_call.1} parent=1 // pred_fallthru
      _
    // Predicated region
    $region78: #{tpu_custom_call.1} parent=1 // pred_check
      _
    $region79: #{tpu_custom_call.1} parent=1 // pred_check_branch
      %1376 = sbr.rel (0) target = $region81
    $region80: #{tpu_custom_call.1} parent=1 // pred_region
      %1377 = dma.done [#allocation3], 32
    $region81: #{tpu_custom_call.1} parent=1 // pred_fallthru
      _
    // Predicated region
    $region82: #{tpu_custom_call.1} parent=1 // pred_check
      _
    $region83: #{tpu_custom_call.1} parent=1 // pred_check_branch
      %1379 = sbr.rel (0) target = $region85
    $region84: #{tpu_custom_call.1} parent=1 // pred_region
      %1380 = dma.done [#allocation7], 32
    $region85: #{tpu_custom_call.1} parent=1 // pred_fallthru
      _
    // Predicated region
    $region86: #{tpu_custom_call.1} parent=1 // pred_check
      _
    $region87: #{tpu_custom_call.1} parent=1 // pred_check_branch
      %1382 = sbr.rel (0) target = $region89
    $region88: #{tpu_custom_call.1} parent=1 // pred_region
      %1383 = dma.done [#allocation7], 32
    $region89: #{tpu_custom_call.1} parent=1 // pred_fallthru
      _
    %1384 = vsyncpa [#allocation3], 1
    %1385 = vsyncpa [#allocation7], 1
    %1386 = vsyncpa [#allocation4], 1

</llo_original>
